<compile_context>
chip_gen: v7x
topology: tpu7x:2x2x1
jax: 0.10.0
libtpu: 0.0.40
codegen_flags: <defaults>
</compile_context>

<pallas_src>
import numpy as np
import jax
import jax.numpy as jnp
from jax.experimental import pallas as pl
from jax.experimental.pallas import tpu as pltpu

_BN_EPS = 1e-5  # torch.nn.BatchNorm2d default


# ----------------------- weight / bias preparation (host) -----------------------

def _bn_fold(bn, eps=_BN_EPS):
    scale = bn["gamma"] / jnp.sqrt(bn["var"] + eps)
    bias = bn["beta"] - bn["mean"] * scale
    return scale, bias


def _stacked_band_weights(w_oihw, scale, w_in, w_out, stride, pad, n_batch):
    """kh-stacked, batch-block-diagonal banded weights (bf16).

    Shape: (kh * N*w_in*Cin, N*w_out*Cout)
      row = kh*(N*w_in*Cin) + n*(w_in*Cin) + wi*Cin + ci
      col = n*(w_out*Cout) + wo*Cout + co
    The kw shifts, W-stride and W zero-padding are absorbed here and the BN
    scale is folded into the columns, so the kernel only does row shifts plus
    a single MXU matmul per conv.
    """
    cout, cin, kh_, kw = w_oihw.shape
    wt = jnp.transpose(w_oihw, (2, 3, 1, 0)) * scale.reshape(1, 1, 1, cout)  # (kh,kw,cin,cout)
    sel = np.zeros((kw, w_in, w_out), np.float32)
    for j in range(kw):
        for wo in range(w_out):
            wi = stride * wo + j - pad
            if 0 <= wi < w_in:
                sel[j, wi, wo] = 1.0
    band = jnp.einsum("jiw,hjcd->hicwd", jnp.asarray(sel), wt)
    band = band.reshape(kh_, w_in * cin, w_out * cout)
    lin, lout = w_in * cin, w_out * cout
    blk = jnp.zeros((kh_, n_batch * lin, n_batch * lout), band.dtype)
    for n in range(n_batch):
        blk = blk.at[:, n * lin:(n + 1) * lin, n * lout:(n + 1) * lout].set(band)
    return blk.reshape(kh_ * n_batch * lin, n_batch * lout).astype(jnp.bfloat16)


def _bias_row(bias, reps):
    # lane = n*(Wo*Cout) + wo*Cout + co  ->  tile bias over (n, wo)
    return jnp.tile(bias, reps).reshape(1, -1).astype(jnp.float32)


# ------------------------------ fused stage kernel ------------------------------

def _make_stage_kernel(cfgs, k, pad, h_s1, l_s1):
    """Build the fused-stage kernel closure over static per-block configs."""
    n_w = sum(6 if c["has_down"] else 4 for c in cfgs)

    def kernel(*refs):
        x_ref = refs[0]
        o_ref = refs[1 + n_w]
        stk_ref = refs[2 + n_w]      # (rows, k*L) f32: stacked matmul operand
        pbuf_ref = refs[3 + n_w]     # (h_s1 + 2*pad, l_s1) f32: row-padded activation
        wrefs = list(refs[1:1 + n_w])
        f32, bf16 = jnp.float32, jnp.bfloat16

        # Zero ONLY the pad rows of the padded-activation scratch, once.
        # Interior rows are fully overwritten before every use; pad rows are
        # never written again.
        zrow = jnp.zeros((pad, pbuf_ref.shape[1]), f32)
        pbuf_ref[0:pad, :] = zrow
        pbuf_ref[pad + h_s1:2 * pad + h_s1, :] = zrow

        def conv_s1(act, w_ref, b_ref):
            # stride-1 conv+bn on a (h_s1, l_s1) f32 value:
            # pad rows in VMEM, assemble the k row-shifted copies into ONE
            # (h_s1, k*l_s1) operand, ONE bf16 cast, ONE MXU matmul.
            pbuf_ref[pad:pad + h_s1, :] = act
            for kh in range(k):
                stk_ref[0:h_s1, kh * l_s1:(kh + 1) * l_s1] = pbuf_ref[kh:kh + h_s1, :]
            a = stk_ref[0:h_s1, 0:k * l_s1].astype(bf16)
            return jnp.dot(a, w_ref[...], preferred_element_type=f32) + b_ref[...]

        act = None
        wi = 0
        for cfg in cfgs:
            ho, l_in = cfg["H_out"], cfg["L_in"]
            w1, b1 = wrefs[wi], wrefs[wi + 1]
            wi += 2
            if cfg["has_down"]:
                wd, bd = wrefs[wi], wrefs[wi + 1]
                wi += 2
            w2, b2 = wrefs[wi], wrefs[wi + 1]
            wi += 2

            if cfg["stride"] == 2:
                # First block, row-stride 2.  Input arrives as row PAIRS
                # (H/2, 2*L_in): phase split = 128-aligned lane slicing,
                # no strided memory access.  out row ho needs orig rows 2*ho+d.
                h2 = cfg["H_in"] // 2
                for kh in range(k):
                    d = kh - pad
                    half, shift = d % 2, d // 2
                    lo, hi = max(0, -shift), min(ho, h2 - shift)
                    c0 = kh * l_in
                    if lo > 0:
                        stk_ref[0:lo, c0:c0 + l_in] = jnp.zeros((lo, l_in), f32)
                    if hi < ho:
                        stk_ref[hi:ho, c0:c0 + l_in] = jnp.zeros((ho - hi, l_in), f32)
                    stk_ref[lo:hi, c0:c0 + l_in] = x_ref[lo + shift:hi + shift,
                                                         half * l_in:(half + 1) * l_in]
                a1 = stk_ref[0:ho, 0:k * l_in].astype(bf16)
                y1 = jnp.maximum(
                    jnp.dot(a1, w1[...], preferred_element_type=f32) + b1[...], 0.0)
                # 1x1 stride-2 conv + bn shortcut: orig rows 2*ho are the first
                # lane-half of each input row pair.
                ad = x_ref[0:ho, 0:l_in].astype(bf16)
                sc = jnp.dot(ad, wd[...], preferred_element_type=f32) + bd[...]
            else:
                src = act if act is not None else x_ref[...]
                y1 = jnp.maximum(conv_s1(src, w1, b1), 0.0)
                if cfg["has_down"]:
                    sc = jnp.dot(src.astype(bf16), wd[...],
                                 preferred_element_type=f32) + bd[...]
                else:
                    sc = src  # identity shortcut, exact f32

            act = jnp.maximum(conv_s1(y1, w2, b2) + sc, 0.0)

        o_ref[...] = act.astype(o_ref.dtype)

    return kernel


def _build_stage(params, k, n, h, w, cin):
    """Static configs, folded weights, scratch shapes and the kernel closure."""
    pad = k // 2
    cfgs, weights = [], []
    hc, wc, cc = h, w, cin
    s1_shapes = set()
    for bi, p in enumerate(params):
        stride = p["stride"]
        has_down = p["down"] is not None
        cout = p["conv1_w"].shape[0]
        if stride == 2:
            assert bi == 0, "stride-2 block must be the first block"
            assert hc % 2 == 0, "stride-2 fused path needs even H"
            ho = (hc + 2 * pad - k) // 2 + 1
            wo = (wc + 2 * pad - k) // 2 + 1
        else:
            ho, wo = hc, wc
        l_in, l_out = n * wc * cc, n * wo * cout

        s1, b1 = _bn_fold(p["bn1"])
        s2, b2 = _bn_fold(p["bn2"])
        blk_w = [_stacked_band_weights(p["conv1_w"], s1, wc, wo, stride, pad, n),
                 _bias_row(b1, n * wo)]
        if has_down:
            sd, bd = _bn_fold(p["down"]["bn"])
            blk_w += [_stacked_band_weights(p["down"]["conv_w"], sd, wc, wo, stride, 0, n),
                      _bias_row(bd, n * wo)]
        blk_w += [_stacked_band_weights(p["conv2_w"], s2, wo, wo, 1, pad, n),
                  _bias_row(b2, n * wo)]
        weights += blk_w

        cfgs.append(dict(stride=stride, H_in=hc, H_out=ho,
                         L_in=l_in, L_out=l_out, has_down=has_down))
        if stride == 1:
            s1_shapes.add((ho, l_in))
        s1_shapes.add((ho, l_out))  # conv2 is always stride 1
        hc, wc, cc = ho, wo, cout

    assert len(s1_shapes) == 1, f"non-uniform stride-1 conv shapes: {s1_shapes}"
    (h_s1, l_s1), = s1_shapes
    stk_rows = max(c["H_out"] for c in cfgs)
    stk_cols = k * max(l_s1, max(c["L_in"] for c in cfgs))
    scratch = [pltpu.VMEM((stk_rows, stk_cols), jnp.float32),
               pltpu.VMEM((h_s1 + 2 * pad, l_s1), jnp.float32)]
    kernel = _make_stage_kernel(cfgs, k, pad, h_s1, l_s1)
    out_shape = jax.ShapeDtypeStruct((hc, n * wc * cc), jnp.float32)
    return kernel, weights, out_shape, scratch, (hc, wc, cc)


def basic_stage_forward(x_nchw, params, kernel_size):
    n, cin, h, w = x_nchw.shape
    kernel, weights, out_shape, scratch, (ho, wo, co) = _build_stage(
        params, kernel_size, n, h, w, cin)

    # NCHW -> lane-dense (H, N*W*C): rows = H (sublanes), lanes = batch*W*C.
    x_lane = jnp.transpose(x_nchw, (2, 0, 3, 1)).reshape(h, n * w * cin)
    x_lane = x_lane.astype(jnp.float32)
    if params[0]["stride"] == 2:
        # Pack consecutive row pairs into lanes (free reshape of contiguous
        # rows) so the kernel's row-stride-2 access is pure lane slicing.
        x_in = x_lane.reshape(h // 2, 2 * n * w * cin)
    else:
        x_in = x_lane

    out = pl.pallas_call(
        kernel,
        out_shape=out_shape,
        scratch_shapes=scratch,
    )(x_in, *weights)

    # (H_out, N*W_out*C_out) -> NCHW
    return jnp.transpose(out.reshape(ho, n, wo, co), (1, 3, 0, 2))


# ------------------------------ params / stage init ------------------------------

def _init_bn(key, c):
    k1, k2, k3, k4 = jax.random.split(key, 4)
    return dict(gamma=1.0 + 0.1 * jax.random.normal(k1, (c,), jnp.float32),
                beta=0.1 * jax.random.normal(k2, (c,), jnp.float32),
                mean=0.1 * jax.random.normal(k3, (c,), jnp.float32),
                var=1.0 + 0.1 * jax.random.uniform(k4, (c,), jnp.float32))


def _init_basic_block(key, in_ch, out_ch, k, stride):
    k1, k2, k3, kb1, kb2, kb3 = jax.random.split(key, 6)
    p = dict(
        stride=stride,
        conv1_w=0.1 * jax.random.normal(k1, (out_ch, in_ch, k, k), jnp.float32),
        bn1=_init_bn(kb1, out_ch),
        conv2_w=0.1 * jax.random.normal(k2, (out_ch, out_ch, k, k), jnp.float32),
        bn2=_init_bn(kb2, out_ch),
        down=None,
    )
    if stride != 1 or in_ch != out_ch:
        p["down"] = dict(
            conv_w=0.1 * jax.random.normal(k3, (out_ch, in_ch, 1, 1), jnp.float32),
            bn=_init_bn(kb3, out_ch),
        )
    return p


def init_basic_stage(key, block_num, kernel_size, in_ch, out_ch, if_plug=False):
    if if_plug:
        # TODO(synk): shuffle_plug_3 is not defined in the provided source.
        raise NotImplementedError("shuffle_plug_3 not defined in source")
    keys = jax.random.split(key, block_num)
    params = []
    if in_ch == out_ch:
        for i in range(block_num):
            params.append(_init_basic_block(keys[i], in_ch, out_ch, kernel_size, 1))
    else:
        params.append(_init_basic_block(keys[0], in_ch, out_ch, kernel_size, 2))
        for i in range(1, block_num):
            params.append(_init_basic_block(keys[i], out_ch, out_ch, kernel_size, 1))
    return params


# ---------------------------- pure-JAX f32 reference -----------------------------

def _reference_stage(x_nchw, params, k, eps=_BN_EPS):
    def bn(y, b):
        s = b["gamma"] / jnp.sqrt(b["var"] + eps)
        t = b["beta"] - b["mean"] * s
        return y * s[None, :, None, None] + t[None, :, None, None]

    def conv(y, w, stride, pad):
        return jax.lax.conv_general_dilated(
            y, w, window_strides=(stride, stride),
            padding=[(pad, pad), (pad, pad)],
            dimension_numbers=("NCHW", "OIHW", "NCHW"))

    pad = k // 2
    y = x_nchw
    for p in params:
        out = jax.nn.relu(bn(conv(y, p["conv1_w"], p["stride"], pad), p["bn1"]))
        out = bn(conv(out, p["conv2_w"], 1, pad), p["bn2"])
        sc = y if p["down"] is None else bn(
            conv(y, p["down"]["conv_w"], p["stride"], 0), p["down"]["bn"])
        y = jax.nn.relu(out + sc)
    return y


# --------------------------------------- main ------------------------------------

if __name__ == "__main__":
    key = jax.random.PRNGKey(0)
    k_x, k_p = jax.random.split(key)

    # basic_stage(block_num=2, kernel_size=3, in_ch=4, out_ch=8, if_plug=False)
    block_num, kernel_size, in_ch, out_ch = 2, 3, 4, 8
    N, H, W = 2, 16, 16

    x = jax.random.normal(k_x, (N, in_ch, H, W), jnp.float32)  # NCHW
    params = init_basic_stage(k_p, block_num, kernel_size, in_ch, out_ch)

    fwd = jax.jit(lambda inp: basic_stage_forward(inp, params, kernel_size))
    out = fwd(x)
    jax.block_until_ready(out)

    # in_ch != out_ch -> first block has stride 2: spatially halved
    assert out.shape == (N, out_ch, H // 2, W // 2), out.shape
    assert bool(jnp.all(jnp.isfinite(out)))

    # Compare against the pure-JAX f32 reference.  The kernel feeds bf16 to the
    # MXU (f32 accumulation), so use a loose tolerance.
    ref = _reference_stage(x, params, kernel_size)
    err = float(jnp.max(jnp.abs(out - ref) / (1.0 + jnp.abs(ref))))
    assert err < 8e-2, f"max scaled err {err}"

    print("KERNEL_OK")
</pallas_src>

<mosaic_0001>
module attributes {stable_mosaic.version = 11 : i64} {
  func.func @kernel(%arg0: memref<8x256xf32, #tpu.memory_space<vmem>>, %arg1: memref<384x128xbf16, #tpu.memory_space<vmem>>, %arg2: memref<1x128xf32, #tpu.memory_space<vmem>>, %arg3: memref<128x128xbf16, #tpu.memory_space<vmem>>, %arg4: memref<1x128xf32, #tpu.memory_space<vmem>>, %arg5: memref<384x128xbf16, #tpu.memory_space<vmem>>, %arg6: memref<1x128xf32, #tpu.memory_space<vmem>>, %arg7: memref<384x128xbf16, #tpu.memory_space<vmem>>, %arg8: memref<1x128xf32, #tpu.memory_space<vmem>>, %arg9: memref<384x128xbf16, #tpu.memory_space<vmem>>, %arg10: memref<1x128xf32, #tpu.memory_space<vmem>>, %arg11: memref<8x128xf32, #tpu.memory_space<vmem>>, %arg12: memref<8x384xf32, #tpu.memory_space<vmem>>, %arg13: memref<10x128xf32, #tpu.memory_space<vmem>>) attributes {dimension_semantics = [], scalar_prefetch = 0 : i64, scratch_operands = 2 : i64, tpu.core_type = #tpu.core_type<tc>} {
    %cst = arith.constant 0.000000e+00 : f32
    %0 = vector.broadcast %cst : f32 to vector<1x128xf32>
    %c0 = arith.constant 0 : index
    %c0_0 = arith.constant 0 : index
    %1 = vector.load %arg13[%c0, %c0_0] : memref<10x128xf32, #tpu.memory_space<vmem>>, vector<1x128xf32>
    tpu.vector_store %arg13[%c0, %c0_0], %0 {strides = array<i32>} : memref<10x128xf32, #tpu.memory_space<vmem>>, vector<1x128xf32>,
    %c9 = arith.constant 9 : index
    %c0_1 = arith.constant 0 : index
    %2 = vector.load %arg13[%c9, %c0_1] : memref<10x128xf32, #tpu.memory_space<vmem>>, vector<1x128xf32>
    tpu.vector_store %arg13[%c9, %c0_1], %0 {strides = array<i32>} : memref<10x128xf32, #tpu.memory_space<vmem>>, vector<1x128xf32>,
    %cst_2 = arith.constant 0.000000e+00 : f32
    %3 = vector.broadcast %cst_2 : f32 to vector<1x128xf32>
    %c0_3 = arith.constant 0 : index
    %c0_4 = arith.constant 0 : index
    %4 = vector.load %arg12[%c0_3, %c0_4] : memref<8x384xf32, #tpu.memory_space<vmem>>, vector<1x128xf32>
    tpu.vector_store %arg12[%c0_3, %c0_4], %3 {strides = array<i32>} : memref<8x384xf32, #tpu.memory_space<vmem>>, vector<1x128xf32>,
    %c0_5 = arith.constant 0 : index
    %c128 = arith.constant 128 : index
    %5 = vector.load %arg0[%c0_5, %c128] : memref<8x256xf32, #tpu.memory_space<vmem>>, vector<7x128xf32>
    %c1 = arith.constant 1 : index
    %c0_6 = arith.constant 0 : index
    %6 = vector.load %arg12[%c1, %c0_6] : memref<8x384xf32, #tpu.memory_space<vmem>>, vector<7x128xf32>
    tpu.vector_store %arg12[%c1, %c0_6], %5 {strides = array<i32>} : memref<8x384xf32, #tpu.memory_space<vmem>>, vector<7x128xf32>,
    %c0_7 = arith.constant 0 : index
    %c0_8 = arith.constant 0 : index
    %7 = vector.load %arg0[%c0_7, %c0_8] : memref<8x256xf32, #tpu.memory_space<vmem>>, vector<8x128xf32>
    %c0_9 = arith.constant 0 : index
    %c128_10 = arith.constant 128 : index
    %8 = vector.load %arg12[%c0_9, %c128_10] : memref<8x384xf32, #tpu.memory_space<vmem>>, vector<8x128xf32>
    tpu.vector_store %arg12[%c0_9, %c128_10], %7 {strides = array<i32>} : memref<8x384xf32, #tpu.memory_space<vmem>>, vector<8x128xf32>,
    %c0_11 = arith.constant 0 : index
    %c128_12 = arith.constant 128 : index
    %9 = vector.load %arg0[%c0_11, %c128_12] : memref<8x256xf32, #tpu.memory_space<vmem>>, vector<8x128xf32>
    %c0_13 = arith.constant 0 : index
    %c256 = arith.constant 256 : index
    %10 = vector.load %arg12[%c0_13, %c256] : memref<8x384xf32, #tpu.memory_space<vmem>>, vector<8x128xf32>
    tpu.vector_store %arg12[%c0_13, %c256], %9 {strides = array<i32>} : memref<8x384xf32, #tpu.memory_space<vmem>>, vector<8x128xf32>,
    %c0_14 = arith.constant 0 : index
    %c0_15 = arith.constant 0 : index
    %11 = vector.load %arg12[%c0_14, %c0_15] : memref<8x384xf32, #tpu.memory_space<vmem>>, vector<8x384xf32>
    %12 = arith.truncf %11 : vector<8x384xf32> to vector<8x384xbf16>
    %c0_16 = arith.constant 0 : index
    %c0_17 = arith.constant 0 : index
    %13 = vector.load %arg1[%c0_16, %c0_17] : memref<384x128xbf16, #tpu.memory_space<vmem>>, vector<384x128xbf16>
    %cst_18 = arith.constant dense<0.000000e+00> : vector<8x128xf32>
    %14 = tpu.matmul %12, %13, %cst_18 {dimension_numbers = #tpu.dot_dimension_numbers<[1], [0], [0], [1], [0, 0, 1, 1], [], []>} : vector<8x384xbf16>, vector<384x128xbf16>, vector<8x128xf32> -> vector<8x128xf32>
    %c0_19 = arith.constant 0 : index
    %c0_20 = arith.constant 0 : index
    %15 = vector.load %arg2[%c0_19, %c0_20] : memref<1x128xf32, #tpu.memory_space<vmem>>, vector<1x128xf32>
    %16 = vector.broadcast %15 : vector<1x128xf32> to vector<8x128xf32>
    %17 = arith.addf %14, %16 : vector<8x128xf32>
    %cst_21 = arith.constant 0.000000e+00 : f32
    %18 = vector.broadcast %cst_21 : f32 to vector<8x128xf32>
    %19 = arith.maximumf %17, %18 : vector<8x128xf32>
    %c0_22 = arith.constant 0 : index
    %c0_23 = arith.constant 0 : index
    %20 = vector.load %arg0[%c0_22, %c0_23] : memref<8x256xf32, #tpu.memory_space<vmem>>, vector<8x128xf32>
    %21 = arith.truncf %20 : vector<8x128xf32> to vector<8x128xbf16>
    %c0_24 = arith.constant 0 : index
    %c0_25 = arith.constant 0 : index
    %22 = vector.load %arg3[%c0_24, %c0_25] : memref<128x128xbf16, #tpu.memory_space<vmem>>, vector<128x128xbf16>
    %cst_26 = arith.constant dense<0.000000e+00> : vector<8x128xf32>
    %23 = tpu.matmul %21, %22, %cst_26 {dimension_numbers = #tpu.dot_dimension_numbers<[1], [0], [0], [1], [0, 0, 1, 1], [], []>} : vector<8x128xbf16>, vector<128x128xbf16>, vector<8x128xf32> -> vector<8x128xf32>
    %c0_27 = arith.constant 0 : index
    %c0_28 = arith.constant 0 : index
    %24 = vector.load %arg4[%c0_27, %c0_28] : memref<1x128xf32, #tpu.memory_space<vmem>>, vector<1x128xf32>
    %25 = vector.broadcast %24 : vector<1x128xf32> to vector<8x128xf32>
    %26 = arith.addf %23, %25 : vector<8x128xf32>
    %c1_29 = arith.constant 1 : index
    %c0_30 = arith.constant 0 : index
    %27 = vector.load %arg13[%c1_29, %c0_30] : memref<10x128xf32, #tpu.memory_space<vmem>>, vector<8x128xf32>
    tpu.vector_store %arg13[%c1_29, %c0_30], %19 {strides = array<i32>} : memref<10x128xf32, #tpu.memory_space<vmem>>, vector<8x128xf32>,
    %c0_31 = arith.constant 0 : index
    %c0_32 = arith.constant 0 : index
    %28 = vector.load %arg13[%c0_31, %c0_32] : memref<10x128xf32, #tpu.memory_space<vmem>>, vector<8x128xf32>
    %c0_33 = arith.constant 0 : index
    %c0_34 = arith.constant 0 : index
    %29 = vector.load %arg12[%c0_33, %c0_34] : memref<8x384xf32, #tpu.memory_space<vmem>>, vector<8x128xf32>
    tpu.vector_store %arg12[%c0_33, %c0_34], %28 {strides = array<i32>} : memref<8x384xf32, #tpu.memory_space<vmem>>, vector<8x128xf32>,
    %c1_35 = arith.constant 1 : index
    %c0_36 = arith.constant 0 : index
    %30 = vector.load %arg13[%c1_35, %c0_36] : memref<10x128xf32, #tpu.memory_space<vmem>>, vector<8x128xf32>
    %c0_37 = arith.constant 0 : index
    %c128_38 = arith.constant 128 : index
    %31 = vector.load %arg12[%c0_37, %c128_38] : memref<8x384xf32, #tpu.memory_space<vmem>>, vector<8x128xf32>
    tpu.vector_store %arg12[%c0_37, %c128_38], %30 {strides = array<i32>} : memref<8x384xf32, #tpu.memory_space<vmem>>, vector<8x128xf32>,
    %c2 = arith.constant 2 : index
    %c0_39 = arith.constant 0 : index
    %32 = vector.load %arg13[%c2, %c0_39] : memref<10x128xf32, #tpu.memory_space<vmem>>, vector<8x128xf32>
    %c0_40 = arith.constant 0 : index
    %c256_41 = arith.constant 256 : index
    %33 = vector.load %arg12[%c0_40, %c256_41] : memref<8x384xf32, #tpu.memory_space<vmem>>, vector<8x128xf32>
    tpu.vector_store %arg12[%c0_40, %c256_41], %32 {strides = array<i32>} : memref<8x384xf32, #tpu.memory_space<vmem>>, vector<8x128xf32>,
    %c0_42 = arith.constant 0 : index
    %c0_43 = arith.constant 0 : index
    %34 = vector.load %arg12[%c0_42, %c0_43] : memref<8x384xf32, #tpu.memory_space<vmem>>, vector<8x384xf32>
    %35 = arith.truncf %34 : vector<8x384xf32> to vector<8x384xbf16>
    %c0_44 = arith.constant 0 : index
    %c0_45 = arith.constant 0 : index
    %36 = vector.load %arg5[%c0_44, %c0_45] : memref<384x128xbf16, #tpu.memory_space<vmem>>, vector<384x128xbf16>
    %cst_46 = arith.constant dense<0.000000e+00> : vector<8x128xf32>
    %37 = tpu.matmul %35, %36, %cst_46 {dimension_numbers = #tpu.dot_dimension_numbers<[1], [0], [0], [1], [0, 0, 1, 1], [], []>} : vector<8x384xbf16>, vector<384x128xbf16>, vector<8x128xf32> -> vector<8x128xf32>
    %c0_47 = arith.constant 0 : index
    %c0_48 = arith.constant 0 : index
    %38 = vector.load %arg6[%c0_47, %c0_48] : memref<1x128xf32, #tpu.memory_space<vmem>>, vector<1x128xf32>
    %39 = vector.broadcast %38 : vector<1x128xf32> to vector<8x128xf32>
    %40 = arith.addf %37, %39 : vector<8x128xf32>
    %41 = arith.addf %40, %26 : vector<8x128xf32>
    %cst_49 = arith.constant 0.000000e+00 : f32
    %42 = vector.broadcast %cst_49 : f32 to vector<8x128xf32>
    %43 = arith.maximumf %41, %42 : vector<8x128xf32>
    %c1_50 = arith.constant 1 : index
    %c0_51 = arith.constant 0 : index
    %44 = vector.load %arg13[%c1_50, %c0_51] : memref<10x128xf32, #tpu.memory_space<vmem>>, vector<8x128xf32>
    tpu.vector_store %arg13[%c1_50, %c0_51], %43 {strides = array<i32>} : memref<10x128xf32, #tpu.memory_space<vmem>>, vector<8x128xf32>,
    %c0_52 = arith.constant 0 : index
    %c0_53 = arith.constant 0 : index
    %45 = vector.load %arg13[%c0_52, %c0_53] : memref<10x128xf32, #tpu.memory_space<vmem>>, vector<8x128xf32>
    %c0_54 = arith.constant 0 : index
    %c0_55 = arith.constant 0 : index
    %46 = vector.load %arg12[%c0_54, %c0_55] : memref<8x384xf32, #tpu.memory_space<vmem>>, vector<8x128xf32>
    tpu.vector_store %arg12[%c0_54, %c0_55], %45 {strides = array<i32>} : memref<8x384xf32, #tpu.memory_space<vmem>>, vector<8x128xf32>,
    %c1_56 = arith.constant 1 : index
    %c0_57 = arith.constant 0 : index
    %47 = vector.load %arg13[%c1_56, %c0_57] : memref<10x128xf32, #tpu.memory_space<vmem>>, vector<8x128xf32>
    %c0_58 = arith.constant 0 : index
    %c128_59 = arith.constant 128 : index
    %48 = vector.load %arg12[%c0_58, %c128_59] : memref<8x384xf32, #tpu.memory_space<vmem>>, vector<8x128xf32>
    tpu.vector_store %arg12[%c0_58, %c128_59], %47 {strides = array<i32>} : memref<8x384xf32, #tpu.memory_space<vmem>>, vector<8x128xf32>,
    %c2_60 = arith.constant 2 : index
    %c0_61 = arith.constant 0 : index
    %49 = vector.load %arg13[%c2_60, %c0_61] : memref<10x128xf32, #tpu.memory_space<vmem>>, vector<8x128xf32>
    %c0_62 = arith.constant 0 : index
    %c256_63 = arith.constant 256 : index
    %50 = vector.load %arg12[%c0_62, %c256_63] : memref<8x384xf32, #tpu.memory_space<vmem>>, vector<8x128xf32>
    tpu.vector_store %arg12[%c0_62, %c256_63], %49 {strides = array<i32>} : memref<8x384xf32, #tpu.memory_space<vmem>>, vector<8x128xf32>,
    %c0_64 = arith.constant 0 : index
    %c0_65 = arith.constant 0 : index
    %51 = vector.load %arg12[%c0_64, %c0_65] : memref<8x384xf32, #tpu.memory_space<vmem>>, vector<8x384xf32>
    %52 = arith.truncf %51 : vector<8x384xf32> to vector<8x384xbf16>
    %c0_66 = arith.constant 0 : index
    %c0_67 = arith.constant 0 : index
    %53 = vector.load %arg7[%c0_66, %c0_67] : memref<384x128xbf16, #tpu.memory_space<vmem>>, vector<384x128xbf16>
    %cst_68 = arith.constant dense<0.000000e+00> : vector<8x128xf32>
    %54 = tpu.matmul %52, %53, %cst_68 {dimension_numbers = #tpu.dot_dimension_numbers<[1], [0], [0], [1], [0, 0, 1, 1], [], []>} : vector<8x384xbf16>, vector<384x128xbf16>, vector<8x128xf32> -> vector<8x128xf32>
    %c0_69 = arith.constant 0 : index
    %c0_70 = arith.constant 0 : index
    %55 = vector.load %arg8[%c0_69, %c0_70] : memref<1x128xf32, #tpu.memory_space<vmem>>, vector<1x128xf32>
    %56 = vector.broadcast %55 : vector<1x128xf32> to vector<8x128xf32>
    %57 = arith.addf %54, %56 : vector<8x128xf32>
    %cst_71 = arith.constant 0.000000e+00 : f32
    %58 = vector.broadcast %cst_71 : f32 to vector<8x128xf32>
    %59 = arith.maximumf %57, %58 : vector<8x128xf32>
    %c1_72 = arith.constant 1 : index
    %c0_73 = arith.constant 0 : index
    %60 = vector.load %arg13[%c1_72, %c0_73] : memref<10x128xf32, #tpu.memory_space<vmem>>, vector<8x128xf32>
    tpu.vector_store %arg13[%c1_72, %c0_73], %59 {strides = array<i32>} : memref<10x128xf32, #tpu.memory_space<vmem>>, vector<8x128xf32>,
    %c0_74 = arith.constant 0 : index
    %c0_75 = arith.constant 0 : index
    %61 = vector.load %arg13[%c0_74, %c0_75] : memref<10x128xf32, #tpu.memory_space<vmem>>, vector<8x128xf32>
    %c0_76 = arith.constant 0 : index
    %c0_77 = arith.constant 0 : index
    %62 = vector.load %arg12[%c0_76, %c0_77] : memref<8x384xf32, #tpu.memory_space<vmem>>, vector<8x128xf32>
    tpu.vector_store %arg12[%c0_76, %c0_77], %61 {strides = array<i32>} : memref<8x384xf32, #tpu.memory_space<vmem>>, vector<8x128xf32>,
    %c1_78 = arith.constant 1 : index
    %c0_79 = arith.constant 0 : index
    %63 = vector.load %arg13[%c1_78, %c0_79] : memref<10x128xf32, #tpu.memory_space<vmem>>, vector<8x128xf32>
    %c0_80 = arith.constant 0 : index
    %c128_81 = arith.constant 128 : index
    %64 = vector.load %arg12[%c0_80, %c128_81] : memref<8x384xf32, #tpu.memory_space<vmem>>, vector<8x128xf32>
    tpu.vector_store %arg12[%c0_80, %c128_81], %63 {strides = array<i32>} : memref<8x384xf32, #tpu.memory_space<vmem>>, vector<8x128xf32>,
    %c2_82 = arith.constant 2 : index
    %c0_83 = arith.constant 0 : index
    %65 = vector.load %arg13[%c2_82, %c0_83] : memref<10x128xf32, #tpu.memory_space<vmem>>, vector<8x128xf32>
    %c0_84 = arith.constant 0 : index
    %c256_85 = arith.constant 256 : index
    %66 = vector.load %arg12[%c0_84, %c256_85] : memref<8x384xf32, #tpu.memory_space<vmem>>, vector<8x128xf32>
    tpu.vector_store %arg12[%c0_84, %c256_85], %65 {strides = array<i32>} : memref<8x384xf32, #tpu.memory_space<vmem>>, vector<8x128xf32>,
    %c0_86 = arith.constant 0 : index
    %c0_87 = arith.constant 0 : index
    %67 = vector.load %arg12[%c0_86, %c0_87] : memref<8x384xf32, #tpu.memory_space<vmem>>, vector<8x384xf32>
    %68 = arith.truncf %67 : vector<8x384xf32> to vector<8x384xbf16>
    %c0_88 = arith.constant 0 : index
    %c0_89 = arith.constant 0 : index
    %69 = vector.load %arg9[%c0_88, %c0_89] : memref<384x128xbf16, #tpu.memory_space<vmem>>, vector<384x128xbf16>
    %cst_90 = arith.constant dense<0.000000e+00> : vector<8x128xf32>
    %70 = tpu.matmul %68, %69, %cst_90 {dimension_numbers = #tpu.dot_dimension_numbers<[1], [0], [0], [1], [0, 0, 1, 1], [], []>} : vector<8x384xbf16>, vector<384x128xbf16>, vector<8x128xf32> -> vector<8x128xf32>
    %c0_91 = arith.constant 0 : index
    %c0_92 = arith.constant 0 : index
    %71 = vector.load %arg10[%c0_91, %c0_92] : memref<1x128xf32, #tpu.memory_space<vmem>>, vector<1x128xf32>
    %72 = vector.broadcast %71 : vector<1x128xf32> to vector<8x128xf32>
    %73 = arith.addf %70, %72 : vector<8x128xf32>
    %74 = arith.addf %73, %43 : vector<8x128xf32>
    %cst_93 = arith.constant 0.000000e+00 : f32
    %75 = vector.broadcast %cst_93 : f32 to vector<8x128xf32>
    %76 = arith.maximumf %74, %75 : vector<8x128xf32>
    %c0_94 = arith.constant 0 : index
    %c0_95 = arith.constant 0 : index
    %77 = vector.load %arg11[%c0_94, %c0_95] : memref<8x128xf32, #tpu.memory_space<vmem>>, vector<8x128xf32>
    tpu.vector_store %arg11[%c0_94, %c0_95], %76 {strides = array<i32>} : memref<8x128xf32, #tpu.memory_space<vmem>>, vector<8x128xf32>,
    return
  }
}

</mosaic_0001>

<llo_original>
// kernel: tile.22
$region0: #{tile.22}
  #allocation0 [shape = 's32[1]{0}', space=sflag, size = 0x4, scoped, tag = 'scoped memory for tile.22']
  %s0 = inlined_call_operand.vmem [shape: f32[8], index: 0, kind: input, shape index: {}]
  %s1 = inlined_call_operand.vmem [shape: f32[16,8], index: 1, kind: output, shape index: {}]
  // Predicated region
  $region2: #{tile.22} parent=0 // pred_check
    _
  $region3: #{tile.22} parent=0 // pred_check_branch
    %3 = sbr.rel (0) target = $region5
  $region4: #{tile.22} parent=0 // pred_region
    _
  $region5: #{tile.22} parent=0 // pred_fallthru
    _
  %v4 = vld [vmem:[%s0] ss:$0 sm:$0xff]
  %5 = vst [vmem:[%s1] sm:$0xff] %v4
  %s6 = scalar_lea.vmem %s1, 8
  %7 = vst [vmem:[%s6] sm:$0xff] %v4

// kernel: tile.23
$region0: #{tile.23}
  %s0 = inlined_call_operand.vmem [shape: f32[16,8], index: 0, kind: input, shape index: {}]
  %s1 = inlined_call_operand.vmem [shape: f32[1,128], index: 1, kind: output, shape index: {}]
  $region1: #{tile.23} parent=0
    #allocation0 [shape = 'u8[4096]{0}', space=vmem, size = 0x1000, scoped, tag = 'scoped mem for output reshape']
    %v2 = vld [vmem:[%s0] sm:$0x1]
    %vm3 = vcmask 64512
    %4 = vst.msk [vmem:[#allocation0] sm:$0x1] %vm3, %v2
    %s5 = scalar_lea.vmem %s0, 15
    %v6 = vld [vmem:[%s5] sm:$0x1]
    %7 = vrot.lane.b32.xlu0 %v6, 120
    %v8 = vpop.permute.xlu0 %7
    %vm9 = vcmask 1048512
    %10 = vst.msk [vmem:[#allocation0] sm:$0x1] %vm9, %v8
    %s11 = scalar_lea.vmem %s0, 14
    %v12 = vld [vmem:[%s11] sm:$0x1]
    %13 = vrot.lane.b32.xlu0 %v12, 112
    %v14 = vpop.permute.xlu0 %13
    %vm15 = vcmask 982912
    %16 = vst.msk [vmem:[#allocation0] sm:$0x1] %vm15, %v14
    %s17 = scalar_lea.vmem %s0, 13
    %v18 = vld [vmem:[%s17] sm:$0x1]
    %19 = vrot.lane.b32.xlu0 %v18, 104
    %v20 = vpop.permute.xlu0 %19
    %vm21 = vcmask 917312
    %22 = vst.msk [vmem:[#allocation0] sm:$0x1] %vm21, %v20
    %s23 = scalar_lea.vmem %s0, 12
    %v24 = vld [vmem:[%s23] sm:$0x1]
    %25 = vrot.lane.b32.xlu0 %v24, 96
    %v26 = vpop.permute.xlu0 %25
    %vm27 = vcmask 851712
    %28 = vst.msk [vmem:[#allocation0] sm:$0x1] %vm27, %v26
    %s29 = scalar_lea.vmem %s0, 11
    %v30 = vld [vmem:[%s29] sm:$0x1]
    %31 = vrot.lane.b32.xlu0 %v30, 88
    %v32 = vpop.permute.xlu0 %31
    %vm33 = vcmask 786112
    %34 = vst.msk [vmem:[#allocation0] sm:$0x1] %vm33, %v32
    %s35 = scalar_lea.vmem %s0, 10
    %v36 = vld [vmem:[%s35] sm:$0x1]
    %37 = vrot.lane.b32.xlu0 %v36, 80
    %v38 = vpop.permute.xlu0 %37
    %vm39 = vcmask 720512
    %40 = vst.msk [vmem:[#allocation0] sm:$0x1] %vm39, %v38
    %s41 = scalar_lea.vmem %s0, 9
    %v42 = vld [vmem:[%s41] sm:$0x1]
    %43 = vrot.lane.b32.xlu0 %v42, 72
    %v44 = vpop.permute.xlu0 %43
    %vm45 = vcmask 654912
    %46 = vst.msk [vmem:[#allocation0] sm:$0x1] %vm45, %v44
    %s47 = scalar_lea.vmem %s0, 8
    %v48 = vld [vmem:[%s47] sm:$0x1]
    %49 = vrot.lane.b32.xlu0 %v48, 64
    %v50 = vpop.permute.xlu0 %49
    %vm51 = vcmask 589312
    %52 = vst.msk [vmem:[#allocation0] sm:$0x1] %vm51, %v50
    %s53 = scalar_lea.vmem %s0, 7
    %v54 = vld [vmem:[%s53] sm:$0x1]
    %55 = vrot.lane.b32.xlu0 %v54, 56
    %v56 = vpop.permute.xlu0 %55
    %vm57 = vcmask 523712
    %58 = vst.msk [vmem:[#allocation0] sm:$0x1] %vm57, %v56
    %s59 = scalar_lea.vmem %s0, 6
    %v60 = vld [vmem:[%s59] sm:$0x1]
    %61 = vrot.lane.b32.xlu0 %v60, 48
    %v62 = vpop.permute.xlu0 %61
    %vm63 = vcmask 458112
    %64 = vst.msk [vmem:[#allocation0] sm:$0x1] %vm63, %v62
    %s65 = scalar_lea.vmem %s0, 5
    %v66 = vld [vmem:[%s65] sm:$0x1]
    %67 = vrot.lane.b32.xlu0 %v66, 40
    %v68 = vpop.permute.xlu0 %67
    %vm69 = vcmask 392512
    %70 = vst.msk [vmem:[#allocation0] sm:$0x1] %vm69, %v68
    %s71 = scalar_lea.vmem %s0, 4
    %v72 = vld [vmem:[%s71] sm:$0x1]
    %73 = vrot.lane.b32.xlu0 %v72, 32
    %v74 = vpop.permute.xlu0 %73
    %vm75 = vcmask 326912
    %76 = vst.msk [vmem:[#allocation0] sm:$0x1] %vm75, %v74
    %s77 = scalar_lea.vmem %s0, 3
    %v78 = vld [vmem:[%s77] sm:$0x1]
    %79 = vrot.lane.b32.xlu0 %v78, 24
    %v80 = vpop.permute.xlu0 %79
    %vm81 = vcmask 261312
    %82 = vst.msk [vmem:[#allocation0] sm:$0x1] %vm81, %v80
    %s83 = scalar_lea.vmem %s0, 2
    %v84 = vld [vmem:[%s83] sm:$0x1]
    %85 = vrot.lane.b32.xlu0 %v84, 16
    %v86 = vpop.permute.xlu0 %85
    %vm87 = vcmask 195712
    %88 = vst.msk [vmem:[#allocation0] sm:$0x1] %vm87, %v86
    %s89 = scalar_lea.vmem %s0, 1
    %v90 = vld [vmem:[%s89] sm:$0x1]
    %91 = vrot.lane.b32.xlu0 %v90, 8
    %v92 = vpop.permute.xlu0 %91
    %vm93 = vcmask 130112
    %94 = vst.msk [vmem:[#allocation0] sm:$0x1] %vm93, %v92
    %s96 = sshllo.u32 0, 1
    %v98 = vld [vmem:[#allocation0] sm:%s96]
    %s99 = sshllo.u32 0, 1
    %100 = vst [vmem:[%s1] sm:%s99] %v98

// kernel: _lambda_.1
$region0: #{_lambda_.1}
  #allocation0 [shape = 'u32[]', space=smem, size = 0x4, offset = 0x4, fixed_abs, tag = 'smem constant byte address 0x4 - core index']
  #allocation1 [shape = 'u32[144,128]{1,0:T(1,128)}', space=vmem, size = 0x12000, scoped, tag = 'internal scratch']
  #allocation2 [shape = 'f32[8,384]{1,0:T(8,128)}', space=vmem, size = 0x3000, scoped, tag = 'scratch operand']
  #allocation3 [shape = 'f32[10,128]{1,0:T(8,128)}', space=vmem, size = 0x2000, scoped, tag = 'scratch operand']
  %s0 = inlined_call_operand.vmem [shape: f32[8,256], index: 0, kind: input, shape index: {}]
  %s1 = inlined_call_operand.vmem [shape: bf16[384,128], index: 1, kind: input, shape index: {}]
  %s2 = inlined_call_operand.vmem [shape: f32[1,128], index: 2, kind: input, shape index: {}]
  %s3 = inlined_call_operand.vmem [shape: bf16[128,128], index: 3, kind: input, shape index: {}]
  %s4 = inlined_call_operand.vmem [shape: f32[1,128], index: 4, kind: input, shape index: {}]
  %s5 = inlined_call_operand.vmem [shape: bf16[384,128], index: 5, kind: input, shape index: {}]
  %s6 = inlined_call_operand.vmem [shape: f32[1,128], index: 6, kind: input, shape index: {}]
  %s7 = inlined_call_operand.vmem [shape: bf16[384,128], index: 7, kind: input, shape index: {}]
  %s8 = inlined_call_operand.vmem [shape: f32[1,128], index: 8, kind: input, shape index: {}]
  %s9 = inlined_call_operand.vmem [shape: bf16[384,128], index: 9, kind: input, shape index: {}]
  %s10 = inlined_call_operand.vmem [shape: f32[1,128], index: 10, kind: input, shape index: {}]
  %s11 = inlined_call_operand.vmem [shape: f32[8,128], index: 11, kind: output, shape index: {}]
  %s12 = sld [smem:[#allocation0]]
  $region54: #{_lambda_.1} parent=0
    _
  %s14 = ssub.s32 1, %s12
  %s15 = scalar_select 0, %s14, %s12
  // Predicated region
  $region2: #{_lambda_.1} parent=0 // pred_check
    _
  $region3: #{_lambda_.1} parent=0 // pred_check_branch
    %17 = sbr.rel (0) target = $region5
  $region4: #{_lambda_.1} parent=0 // pred_region
    _
  $region5: #{_lambda_.1} parent=0 // pred_fallthru
    _
  // Predicated region
  $region6: #{_lambda_.1} parent=0 // pred_check
    _
  $region7: #{_lambda_.1} parent=0 // pred_check_branch
    %19 = sbr.rel (0) target = $region9
  $region8: #{_lambda_.1} parent=0 // pred_region
    _
  $region9: #{_lambda_.1} parent=0 // pred_fallthru
    _
  // Predicated region
  $region10: #{_lambda_.1} parent=0 // pred_check
    _
  $region11: #{_lambda_.1} parent=0 // pred_check_branch
    %21 = sbr.rel (0) target = $region13
  $region12: #{_lambda_.1} parent=0 // pred_region
    _
  $region13: #{_lambda_.1} parent=0 // pred_fallthru
    _
  // Predicated region
  $region14: #{_lambda_.1} parent=0 // pred_check
    _
  $region15: #{_lambda_.1} parent=0 // pred_check_branch
    %23 = sbr.rel (0) target = $region17
  $region16: #{_lambda_.1} parent=0 // pred_region
    _
  $region17: #{_lambda_.1} parent=0 // pred_fallthru
    _
  // Predicated region
  $region18: #{_lambda_.1} parent=0 // pred_check
    _
  $region19: #{_lambda_.1} parent=0 // pred_check_branch
    %25 = sbr.rel (0) target = $region21
  $region20: #{_lambda_.1} parent=0 // pred_region
    _
  $region21: #{_lambda_.1} parent=0 // pred_fallthru
    _
  // Predicated region
  $region22: #{_lambda_.1} parent=0 // pred_check
    _
  $region23: #{_lambda_.1} parent=0 // pred_check_branch
    %27 = sbr.rel (0) target = $region25
  $region24: #{_lambda_.1} parent=0 // pred_region
    _
  $region25: #{_lambda_.1} parent=0 // pred_fallthru
    _
  // Predicated region
  $region26: #{_lambda_.1} parent=0 // pred_check
    _
  $region27: #{_lambda_.1} parent=0 // pred_check_branch
    %29 = sbr.rel (0) target = $region29
  $region28: #{_lambda_.1} parent=0 // pred_region
    _
  $region29: #{_lambda_.1} parent=0 // pred_fallthru
    _
  // Predicated region
  $region30: #{_lambda_.1} parent=0 // pred_check
    _
  $region31: #{_lambda_.1} parent=0 // pred_check_branch
    %31 = sbr.rel (0) target = $region33
  $region32: #{_lambda_.1} parent=0 // pred_region
    _
  $region33: #{_lambda_.1} parent=0 // pred_fallthru
    _
  // Predicated region
  $region34: #{_lambda_.1} parent=0 // pred_check
    _
  $region35: #{_lambda_.1} parent=0 // pred_check_branch
    %33 = sbr.rel (0) target = $region37
  $region36: #{_lambda_.1} parent=0 // pred_region
    _
  $region37: #{_lambda_.1} parent=0 // pred_fallthru
    _
  // Predicated region
  $region38: #{_lambda_.1} parent=0 // pred_check
    _
  $region39: #{_lambda_.1} parent=0 // pred_check_branch
    %35 = sbr.rel (0) target = $region41
  $region40: #{_lambda_.1} parent=0 // pred_region
    _
  $region41: #{_lambda_.1} parent=0 // pred_fallthru
    _
  // Predicated region
  $region42: #{_lambda_.1} parent=0 // pred_check
    _
  $region43: #{_lambda_.1} parent=0 // pred_check_branch
    %37 = sbr.rel (0) target = $region45
  $region44: #{_lambda_.1} parent=0 // pred_region
    _
  $region45: #{_lambda_.1} parent=0 // pred_fallthru
    _
  %39 = vst [vmem:[#allocation3] sm:$0x1] 0.0
  %40 = vst [vmem:[#allocation3 + $0x9] sm:$0x1] 0.0
  %41 = vst [vmem:[#allocation2] sm:$0x1] 0.0
  %v42 = vld [vmem:[%s0 + $0x8] sm:$0x7f]
  %v44 = vrot.slane %v42, 7
  %46 = vst [vmem:[#allocation2] sm:$0xfe] %v44
  %v47 = vld [vmem:[%s0] sm:$0xff]
  %48 = vst [vmem:[#allocation2 + $0x8] sm:$0xff] %v47
  %v49 = vld [vmem:[%s0 + $0x8] sm:$0xff]
  %50 = vst [vmem:[#allocation2 + $0x10] sm:$0xff] %v49
  %v51 = vld [vmem:[#allocation2] sm:$0xff]
  %v52 = vld [vmem:[#allocation2 + $0x8] sm:$0xff]
  %v53 = vld [vmem:[#allocation2 + $0x10] sm:$0xff]
  %v54 = vpack.c.bf16 %v51, %v51
  %v55 = vpack.c.bf16 %v52, %v52
  %v56 = vpack.c.bf16 %v53, %v53
  %v57 = vld [vmem:[%s1] sm:$0xf]
  %v58 = vld [vmem:[%s1 + $0x4] sm:$0xf]
  %v59 = vld [vmem:[%s1 + $0x8] sm:$0xf]
  %v60 = vld [vmem:[%s1 + $0xc] sm:$0xf]
  %v61 = vld [vmem:[%s1 + $0x10] sm:$0xf]
  %v62 = vld [vmem:[%s1 + $0x14] sm:$0xf]
  %v63 = vld [vmem:[%s1 + $0x18] sm:$0xf]
  %v64 = vld [vmem:[%s1 + $0x1c] sm:$0xf]
  %v65 = vld [vmem:[%s1 + $0x20] sm:$0xf]
  %v66 = vld [vmem:[%s1 + $0x24] sm:$0xf]
  %v67 = vld [vmem:[%s1 + $0x28] sm:$0xf]
  %v68 = vld [vmem:[%s1 + $0x2c] sm:$0xf]
  %v69 = vld [vmem:[%s1 + $0x30] sm:$0xf]
  %v70 = vld [vmem:[%s1 + $0x34] sm:$0xf]
  %v71 = vld [vmem:[%s1 + $0x38] sm:$0xf]
  %v72 = vld [vmem:[%s1 + $0x3c] sm:$0xf]
  %v73 = vld [vmem:[%s1 + $0x40] sm:$0xf]
  %v74 = vld [vmem:[%s1 + $0x44] sm:$0xf]
  %v75 = vld [vmem:[%s1 + $0x48] sm:$0xf]
  %v76 = vld [vmem:[%s1 + $0x4c] sm:$0xf]
  %v77 = vld [vmem:[%s1 + $0x50] sm:$0xf]
  %v78 = vld [vmem:[%s1 + $0x54] sm:$0xf]
  %v79 = vld [vmem:[%s1 + $0x58] sm:$0xf]
  %v80 = vld [vmem:[%s1 + $0x5c] sm:$0xf]
  %v81 = vld [vmem:[%s1 + $0x60] sm:$0xf]
  %v82 = vld [vmem:[%s1 + $0x64] sm:$0xf]
  %v83 = vld [vmem:[%s1 + $0x68] sm:$0xf]
  %v84 = vld [vmem:[%s1 + $0x6c] sm:$0xf]
  %v85 = vld [vmem:[%s1 + $0x70] sm:$0xf]
  %v86 = vld [vmem:[%s1 + $0x74] sm:$0xf]
  %v87 = vld [vmem:[%s1 + $0x78] sm:$0xf]
  %v88 = vld [vmem:[%s1 + $0x7c] sm:$0xf]
  %v89 = vld [vmem:[%s1 + $0x80] sm:$0xf]
  %v90 = vld [vmem:[%s1 + $0x84] sm:$0xf]
  %v91 = vld [vmem:[%s1 + $0x88] sm:$0xf]
  %v92 = vld [vmem:[%s1 + $0x8c] sm:$0xf]
  %v93 = vld [vmem:[%s1 + $0x90] sm:$0xf]
  %v94 = vld [vmem:[%s1 + $0x94] sm:$0xf]
  %v95 = vld [vmem:[%s1 + $0x98] sm:$0xf]
  %v96 = vld [vmem:[%s1 + $0x9c] sm:$0xf]
  %v97 = vld [vmem:[%s1 + $0xa0] sm:$0xf]
  %v98 = vld [vmem:[%s1 + $0xa4] sm:$0xf]
  %v99 = vld [vmem:[%s1 + $0xa8] sm:$0xf]
  %v100 = vld [vmem:[%s1 + $0xac] sm:$0xf]
  %v101 = vld [vmem:[%s1 + $0xb0] sm:$0xf]
  %v102 = vld [vmem:[%s1 + $0xb4] sm:$0xf]
  %v103 = vld [vmem:[%s1 + $0xb8] sm:$0xf]
  %v104 = vld [vmem:[%s1 + $0xbc] sm:$0xf]
  %v105 = vld [vmem:[%s2] sm:$0x1]
  %v107 = vlaneseq
  %v108 = vshrl.u32 %v107, 7
  %v109 = vsub.s32 0, %v108
  %v110 = vrot.slane %v105, %v109
  %v160 = vunpack.c.l.b16 %v57
  %v161 = vunpack.c.l.b16 %v58
  %v162 = vunpack.c.l.b16 %v59
  %v163 = vunpack.c.l.b16 %v60
  %v164 = vunpack.c.l.b16 %v61
  %v165 = vunpack.c.l.b16 %v62
  %v166 = vunpack.c.l.b16 %v63
  %v167 = vunpack.c.l.b16 %v64
  %v168 = vunpack.c.l.b16 %v65
  %v169 = vunpack.c.l.b16 %v66
  %v170 = vunpack.c.l.b16 %v67
  %v171 = vunpack.c.l.b16 %v68
  %v172 = vunpack.c.l.b16 %v69
  %v173 = vunpack.c.l.b16 %v70
  %v174 = vunpack.c.l.b16 %v71
  %v175 = vunpack.c.l.b16 %v72
  %v176 = vunpack.c.l.b16 %v73
  %v177 = vunpack.c.l.b16 %v74
  %v178 = vunpack.c.l.b16 %v75
  %v179 = vunpack.c.l.b16 %v76
  %v180 = vunpack.c.l.b16 %v77
  %v181 = vunpack.c.l.b16 %v78
  %v182 = vunpack.c.l.b16 %v79
  %v183 = vunpack.c.l.b16 %v80
  %v184 = vunpack.c.l.b16 %v81
  %v185 = vunpack.c.l.b16 %v82
  %v186 = vunpack.c.l.b16 %v83
  %v187 = vunpack.c.l.b16 %v84
  %v188 = vunpack.c.l.b16 %v85
  %v189 = vunpack.c.l.b16 %v86
  %v190 = vunpack.c.l.b16 %v87
  %v191 = vunpack.c.l.b16 %v88
  %v192 = vunpack.c.l.b16 %v89
  %v193 = vunpack.c.l.b16 %v90
  %v194 = vunpack.c.l.b16 %v91
  %v195 = vunpack.c.l.b16 %v92
  %v196 = vunpack.c.l.b16 %v93
  %v197 = vunpack.c.l.b16 %v94
  %v198 = vunpack.c.l.b16 %v95
  %v199 = vunpack.c.l.b16 %v96
  %v200 = vunpack.c.l.b16 %v97
  %v201 = vunpack.c.l.b16 %v98
  %v202 = vunpack.c.l.b16 %v99
  %v203 = vunpack.c.l.b16 %v100
  %v204 = vunpack.c.l.b16 %v101
  %v205 = vunpack.c.l.b16 %v102
  %v206 = vunpack.c.l.b16 %v103
  %v207 = vunpack.c.l.b16 %v104
  %v208 = vpack.c.b16 %v161, %v160
  %v209 = vpack.c.b16 %v163, %v162
  %v210 = vpack.c.b16 %v165, %v164
  %v211 = vpack.c.b16 %v167, %v166
  %v212 = vpack.c.b16 %v169, %v168
  %v213 = vpack.c.b16 %v171, %v170
  %v214 = vpack.c.b16 %v173, %v172
  %v215 = vpack.c.b16 %v175, %v174
  %v216 = vpack.c.b16 %v177, %v176
  %v217 = vpack.c.b16 %v179, %v178
  %v218 = vpack.c.b16 %v181, %v180
  %v219 = vpack.c.b16 %v183, %v182
  %v220 = vpack.c.b16 %v185, %v184
  %v221 = vpack.c.b16 %v187, %v186
  %v222 = vpack.c.b16 %v189, %v188
  %v223 = vpack.c.b16 %v191, %v190
  %v224 = vpack.c.b16 %v193, %v192
  %v225 = vpack.c.b16 %v195, %v194
  %v226 = vpack.c.b16 %v197, %v196
  %v227 = vpack.c.b16 %v199, %v198
  %v228 = vpack.c.b16 %v201, %v200
  %v229 = vpack.c.b16 %v203, %v202
  %v230 = vpack.c.b16 %v205, %v204
  %v231 = vpack.c.b16 %v207, %v206
  %256 = vmatprep.subr.bf16.mxu0 0
  %257 = vmatpush1.bf16.msra.mxu0 %v208
  %258 = vmatprep.subr.bf16.mxu0 0
  %259 = vmatpush1.bf16.msra.mxu0 %v209
  %260 = vmatprep.subr.bf16.mxu0 0
  %261 = vmatpush1.bf16.msra.mxu0 %v210
  %262 = vmatprep.subr.bf16.mxu0 0
  %263 = vmatpush1.bf16.msra.mxu0 %v211
  %264 = vmatprep.subr.bf16.mxu0 0
  %265 = vmatpush1.bf16.msra.mxu0 %v212
  %266 = vmatprep.subr.bf16.mxu0 0
  %267 = vmatpush1.bf16.msra.mxu0 %v213
  %268 = vmatprep.subr.bf16.mxu0 0
  %269 = vmatpush1.bf16.msra.mxu0 %v214
  %270 = vmatprep.subr.bf16.mxu0 0
  %271 = vmatpush1.bf16.msra.mxu0 %v215
  %272 = vmatprep.subr.bf16.mxu0 0
  %273 = vmatpush1.bf16.msra.mxu0 %v216
  %274 = vmatprep.subr.bf16.mxu0 0
  %275 = vmatpush1.bf16.msra.mxu0 %v217
  %276 = vmatprep.subr.bf16.mxu0 0
  %277 = vmatpush1.bf16.msra.mxu0 %v218
  %278 = vmatprep.subr.bf16.mxu0 0
  %279 = vmatpush1.bf16.msra.mxu0 %v219
  %280 = vmatprep.subr.bf16.mxu0 0
  %281 = vmatpush1.bf16.msra.mxu0 %v220
  %282 = vmatprep.subr.bf16.mxu0 0
  %283 = vmatpush1.bf16.msra.mxu0 %v221
  %284 = vmatprep.subr.bf16.mxu0 0
  %285 = vmatpush1.bf16.msra.mxu0 %v222
  %286 = vmatprep.subr.bf16.mxu0 0
  %287 = vmatpush1.bf16.msra.mxu0 %v223
  %288 = vmatprep.mubr.bf16.mxu0 %v55
  %289 = vmatmul.mubr.bf16.gmra.mrb[0].mxu0 %v54
  %v290 = vpop.f32.mrb[0].mxu0
  %v291 = vadd.f32 %v110, %v290
  %v292 = vpop.f32.mrb[0].mxu0
  %v293 = vpop.f32.mrb[0].mxu0
  %v294 = vpop.f32.mrb[0].mxu0
  %295 = vdwg.mxu0
  %296 = vmatprep.subr.bf16.mxu0 0
  %297 = vmatpush1.bf16.msra.mxu0 %v224
  %298 = vmatprep.subr.bf16.mxu0 0
  %299 = vmatpush1.bf16.msra.mxu0 %v225
  %300 = vmatprep.subr.bf16.mxu0 0
  %301 = vmatpush1.bf16.msra.mxu0 %v226
  %302 = vmatprep.subr.bf16.mxu0 0
  %303 = vmatpush1.bf16.msra.mxu0 %v227
  %304 = vmatprep.subr.bf16.mxu0 0
  %305 = vmatpush1.bf16.msra.mxu0 %v228
  %306 = vmatprep.subr.bf16.mxu0 0
  %307 = vmatpush1.bf16.msra.mxu0 %v229
  %308 = vmatprep.subr.bf16.mxu0 0
  %309 = vmatpush1.bf16.msra.mxu0 %v230
  %310 = vmatprep.subr.bf16.mxu0 0
  %311 = vmatpush1.bf16.msra.mxu0 %v231
  %312 = vmatprep.subr.bf16.mxu0 0
  %313 = vmatpush1.bf16.msra.mxu0 0
  %314 = vmatprep.subr.bf16.mxu0 0
  %315 = vmatpush1.bf16.msra.mxu0 0
  %316 = vmatprep.subr.bf16.mxu0 0
  %317 = vmatpush1.bf16.msra.mxu0 0
  %318 = vmatprep.subr.bf16.mxu0 0
  %319 = vmatpush1.bf16.msra.mxu0 0
  %320 = vmatprep.subr.bf16.mxu0 0
  %321 = vmatpush1.bf16.msra.mxu0 0
  %322 = vmatprep.subr.bf16.mxu0 0
  %323 = vmatpush1.bf16.msra.mxu0 0
  %324 = vmatprep.subr.bf16.mxu0 0
  %325 = vmatpush1.bf16.msra.mxu0 0
  %326 = vmatprep.subr.bf16.mxu0 0
  %327 = vmatpush1.bf16.msra.mxu0 0
  %328 = vmatprep.mubr.bf16.mxu0 0
  %329 = vmatmul.mubr.bf16.gmra.mrb[0].mxu0 %v56
  %v330 = vpop.f32.mrb[0].mxu0
  %v331 = vadd.f32 %v291, %v330
  %v332 = vpop.f32.mrb[0].mxu0
  %v333 = vpop.f32.mrb[0].mxu0
  %v334 = vpop.f32.mrb[0].mxu0
  %335 = vdwg.mxu0
  %v336 = vmax.f32 %v331, 0.0
  %v337 = vld [vmem:[%s0] sm:$0xff]
  %v338 = vpack.c.bf16 %v337, %v337
  %v339 = vld [vmem:[%s3] sm:$0xf]
  %v340 = vld [vmem:[%s3 + $0x4] sm:$0xf]
  %v341 = vld [vmem:[%s3 + $0x8] sm:$0xf]
  %v342 = vld [vmem:[%s3 + $0xc] sm:$0xf]
  %v343 = vld [vmem:[%s3 + $0x10] sm:$0xf]
  %v344 = vld [vmem:[%s3 + $0x14] sm:$0xf]
  %v345 = vld [vmem:[%s3 + $0x18] sm:$0xf]
  %v346 = vld [vmem:[%s3 + $0x1c] sm:$0xf]
  %v347 = vld [vmem:[%s3 + $0x20] sm:$0xf]
  %v348 = vld [vmem:[%s3 + $0x24] sm:$0xf]
  %v349 = vld [vmem:[%s3 + $0x28] sm:$0xf]
  %v350 = vld [vmem:[%s3 + $0x2c] sm:$0xf]
  %v351 = vld [vmem:[%s3 + $0x30] sm:$0xf]
  %v352 = vld [vmem:[%s3 + $0x34] sm:$0xf]
  %v353 = vld [vmem:[%s3 + $0x38] sm:$0xf]
  %v354 = vld [vmem:[%s3 + $0x3c] sm:$0xf]
  %v355 = vld [vmem:[%s4] sm:$0x1]
  %v357 = vlaneseq
  %v358 = vshrl.u32 %v357, 7
  %v359 = vsub.s32 0, %v358
  %v360 = vrot.slane %v355, %v359
  %v378 = vunpack.c.l.b16 %v339
  %v379 = vunpack.c.l.b16 %v340
  %v380 = vunpack.c.l.b16 %v341
  %v381 = vunpack.c.l.b16 %v342
  %v382 = vunpack.c.l.b16 %v343
  %v383 = vunpack.c.l.b16 %v344
  %v384 = vunpack.c.l.b16 %v345
  %v385 = vunpack.c.l.b16 %v346
  %v386 = vunpack.c.l.b16 %v347
  %v387 = vunpack.c.l.b16 %v348
  %v388 = vunpack.c.l.b16 %v349
  %v389 = vunpack.c.l.b16 %v350
  %v390 = vunpack.c.l.b16 %v351
  %v391 = vunpack.c.l.b16 %v352
  %v392 = vunpack.c.l.b16 %v353
  %v393 = vunpack.c.l.b16 %v354
  %v394 = vpack.c.b16 %v379, %v378
  %v395 = vpack.c.b16 %v381, %v380
  %v396 = vpack.c.b16 %v383, %v382
  %v397 = vpack.c.b16 %v385, %v384
  %v398 = vpack.c.b16 %v387, %v386
  %v399 = vpack.c.b16 %v389, %v388
  %v400 = vpack.c.b16 %v391, %v390
  %v401 = vpack.c.b16 %v393, %v392
  %410 = vmatprep.subr.bf16.mxu0 0
  %411 = vmatpush1.bf16.msra.mxu0 %v394
  %412 = vmatprep.subr.bf16.mxu0 0
  %413 = vmatpush1.bf16.msra.mxu0 %v395
  %414 = vmatprep.subr.bf16.mxu0 0
  %415 = vmatpush1.bf16.msra.mxu0 %v396
  %416 = vmatprep.subr.bf16.mxu0 0
  %417 = vmatpush1.bf16.msra.mxu0 %v397
  %418 = vmatprep.subr.bf16.mxu0 0
  %419 = vmatpush1.bf16.msra.mxu0 %v398
  %420 = vmatprep.subr.bf16.mxu0 0
  %421 = vmatpush1.bf16.msra.mxu0 %v399
  %422 = vmatprep.subr.bf16.mxu0 0
  %423 = vmatpush1.bf16.msra.mxu0 %v400
  %424 = vmatprep.subr.bf16.mxu0 0
  %425 = vmatpush1.bf16.msra.mxu0 %v401
  %426 = vmatprep.subr.bf16.mxu0 0
  %427 = vmatpush1.bf16.msra.mxu0 0
  %428 = vmatprep.subr.bf16.mxu0 0
  %429 = vmatpush1.bf16.msra.mxu0 0
  %430 = vmatprep.subr.bf16.mxu0 0
  %431 = vmatpush1.bf16.msra.mxu0 0
  %432 = vmatprep.subr.bf16.mxu0 0
  %433 = vmatpush1.bf16.msra.mxu0 0
  %434 = vmatprep.subr.bf16.mxu0 0
  %435 = vmatpush1.bf16.msra.mxu0 0
  %436 = vmatprep.subr.bf16.mxu0 0
  %437 = vmatpush1.bf16.msra.mxu0 0
  %438 = vmatprep.subr.bf16.mxu0 0
  %439 = vmatpush1.bf16.msra.mxu0 0
  %440 = vmatprep.subr.bf16.mxu0 0
  %441 = vmatpush1.bf16.msra.mxu0 0
  %442 = vmatprep.mubr.bf16.mxu0 0
  %443 = vmatmul.mubr.bf16.gmra.mrb[0].mxu0 %v338
  %v444 = vpop.f32.mrb[0].mxu0
  %v445 = vadd.f32 %v360, %v444
  %v446 = vpop.f32.mrb[0].mxu0
  %v447 = vpop.f32.mrb[0].mxu0
  %v448 = vpop.f32.mrb[0].mxu0
  %449 = vdwg.mxu0
  %450 = vst [vmem:[#allocation3 + $0x1] sm:$0xff] %v336
  %v451 = vld [vmem:[#allocation3] sm:$0xff]
  %452 = vst [vmem:[#allocation2] sm:$0xff] %v451
  %v453 = vld [vmem:[#allocation3 + $0x1] sm:$0xff]
  %454 = vst [vmem:[#allocation2 + $0x8] sm:$0xff] %v453
  %v455 = vld [vmem:[#allocation3 + $0x2] sm:$0xff]
  %456 = vst [vmem:[#allocation2 + $0x10] sm:$0xff] %v455
  %v457 = vld [vmem:[#allocation2] sm:$0xff]
  %v458 = vld [vmem:[#allocation2 + $0x8] sm:$0xff]
  %v459 = vld [vmem:[#allocation2 + $0x10] sm:$0xff]
  %v460 = vpack.c.bf16 %v457, %v457
  %v461 = vpack.c.bf16 %v458, %v458
  %v462 = vpack.c.bf16 %v459, %v459
  %v463 = vld [vmem:[%s5] sm:$0xf]
  %v464 = vld [vmem:[%s5 + $0x4] sm:$0xf]
  %v465 = vld [vmem:[%s5 + $0x8] sm:$0xf]
  %v466 = vld [vmem:[%s5 + $0xc] sm:$0xf]
  %v467 = vld [vmem:[%s5 + $0x10] sm:$0xf]
  %v468 = vld [vmem:[%s5 + $0x14] sm:$0xf]
  %v469 = vld [vmem:[%s5 + $0x18] sm:$0xf]
  %v470 = vld [vmem:[%s5 + $0x1c] sm:$0xf]
  %v471 = vld [vmem:[%s5 + $0x20] sm:$0xf]
  %v472 = vld [vmem:[%s5 + $0x24] sm:$0xf]
  %v473 = vld [vmem:[%s5 + $0x28] sm:$0xf]
  %v474 = vld [vmem:[%s5 + $0x2c] sm:$0xf]
  %v475 = vld [vmem:[%s5 + $0x30] sm:$0xf]
  %v476 = vld [vmem:[%s5 + $0x34] sm:$0xf]
  %v477 = vld [vmem:[%s5 + $0x38] sm:$0xf]
  %v478 = vld [vmem:[%s5 + $0x3c] sm:$0xf]
  %v479 = vld [vmem:[%s5 + $0x40] sm:$0xf]
  %v480 = vld [vmem:[%s5 + $0x44] sm:$0xf]
  %v481 = vld [vmem:[%s5 + $0x48] sm:$0xf]
  %v482 = vld [vmem:[%s5 + $0x4c] sm:$0xf]
  %v483 = vld [vmem:[%s5 + $0x50] sm:$0xf]
  %v484 = vld [vmem:[%s5 + $0x54] sm:$0xf]
  %v485 = vld [vmem:[%s5 + $0x58] sm:$0xf]
  %v486 = vld [vmem:[%s5 + $0x5c] sm:$0xf]
  %v487 = vld [vmem:[%s5 + $0x60] sm:$0xf]
  %v488 = vld [vmem:[%s5 + $0x64] sm:$0xf]
  %v489 = vld [vmem:[%s5 + $0x68] sm:$0xf]
  %v490 = vld [vmem:[%s5 + $0x6c] sm:$0xf]
  %v491 = vld [vmem:[%s5 + $0x70] sm:$0xf]
  %v492 = vld [vmem:[%s5 + $0x74] sm:$0xf]
  %v493 = vld [vmem:[%s5 + $0x78] sm:$0xf]
  %v494 = vld [vmem:[%s5 + $0x7c] sm:$0xf]
  %v495 = vld [vmem:[%s5 + $0x80] sm:$0xf]
  %v496 = vld [vmem:[%s5 + $0x84] sm:$0xf]
  %v497 = vld [vmem:[%s5 + $0x88] sm:$0xf]
  %v498 = vld [vmem:[%s5 + $0x8c] sm:$0xf]
  %v499 = vld [vmem:[%s5 + $0x90] sm:$0xf]
  %v500 = vld [vmem:[%s5 + $0x94] sm:$0xf]
  %v501 = vld [vmem:[%s5 + $0x98] sm:$0xf]
  %v502 = vld [vmem:[%s5 + $0x9c] sm:$0xf]
  %v503 = vld [vmem:[%s5 + $0xa0] sm:$0xf]
  %v504 = vld [vmem:[%s5 + $0xa4] sm:$0xf]
  %v505 = vld [vmem:[%s5 + $0xa8] sm:$0xf]
  %v506 = vld [vmem:[%s5 + $0xac] sm:$0xf]
  %v507 = vld [vmem:[%s5 + $0xb0] sm:$0xf]
  %v508 = vld [vmem:[%s5 + $0xb4] sm:$0xf]
  %v509 = vld [vmem:[%s5 + $0xb8] sm:$0xf]
  %v510 = vld [vmem:[%s5 + $0xbc] sm:$0xf]
  %v511 = vld [vmem:[%s6] sm:$0x1]
  %v513 = vlaneseq
  %v514 = vshrl.u32 %v513, 7
  %v515 = vsub.s32 0, %v514
  %v516 = vrot.slane %v511, %v515
  %v566 = vunpack.c.l.b16 %v463
  %v567 = vunpack.c.l.b16 %v464
  %v568 = vunpack.c.l.b16 %v465
  %v569 = vunpack.c.l.b16 %v466
  %v570 = vunpack.c.l.b16 %v467
  %v571 = vunpack.c.l.b16 %v468
  %v572 = vunpack.c.l.b16 %v469
  %v573 = vunpack.c.l.b16 %v470
  %v574 = vunpack.c.l.b16 %v471
  %v575 = vunpack.c.l.b16 %v472
  %v576 = vunpack.c.l.b16 %v473
  %v577 = vunpack.c.l.b16 %v474
  %v578 = vunpack.c.l.b16 %v475
  %v579 = vunpack.c.l.b16 %v476
  %v580 = vunpack.c.l.b16 %v477
  %v581 = vunpack.c.l.b16 %v478
  %v582 = vunpack.c.l.b16 %v479
  %v583 = vunpack.c.l.b16 %v480
  %v584 = vunpack.c.l.b16 %v481
  %v585 = vunpack.c.l.b16 %v482
  %v586 = vunpack.c.l.b16 %v483
  %v587 = vunpack.c.l.b16 %v484
  %v588 = vunpack.c.l.b16 %v485
  %v589 = vunpack.c.l.b16 %v486
  %v590 = vunpack.c.l.b16 %v487
  %v591 = vunpack.c.l.b16 %v488
  %v592 = vunpack.c.l.b16 %v489
  %v593 = vunpack.c.l.b16 %v490
  %v594 = vunpack.c.l.b16 %v491
  %v595 = vunpack.c.l.b16 %v492
  %v596 = vunpack.c.l.b16 %v493
  %v597 = vunpack.c.l.b16 %v494
  %v598 = vunpack.c.l.b16 %v495
  %v599 = vunpack.c.l.b16 %v496
  %v600 = vunpack.c.l.b16 %v497
  %v601 = vunpack.c.l.b16 %v498
  %v602 = vunpack.c.l.b16 %v499
  %v603 = vunpack.c.l.b16 %v500
  %v604 = vunpack.c.l.b16 %v501
  %v605 = vunpack.c.l.b16 %v502
  %v606 = vunpack.c.l.b16 %v503
  %v607 = vunpack.c.l.b16 %v504
  %v608 = vunpack.c.l.b16 %v505
  %v609 = vunpack.c.l.b16 %v506
  %v610 = vunpack.c.l.b16 %v507
  %v611 = vunpack.c.l.b16 %v508
  %v612 = vunpack.c.l.b16 %v509
  %v613 = vunpack.c.l.b16 %v510
  %v614 = vpack.c.b16 %v567, %v566
  %v615 = vpack.c.b16 %v569, %v568
  %v616 = vpack.c.b16 %v571, %v570
  %v617 = vpack.c.b16 %v573, %v572
  %v618 = vpack.c.b16 %v575, %v574
  %v619 = vpack.c.b16 %v577, %v576
  %v620 = vpack.c.b16 %v579, %v578
  %v621 = vpack.c.b16 %v581, %v580
  %v622 = vpack.c.b16 %v583, %v582
  %v623 = vpack.c.b16 %v585, %v584
  %v624 = vpack.c.b16 %v587, %v586
  %v625 = vpack.c.b16 %v589, %v588
  %v626 = vpack.c.b16 %v591, %v590
  %v627 = vpack.c.b16 %v593, %v592
  %v628 = vpack.c.b16 %v595, %v594
  %v629 = vpack.c.b16 %v597, %v596
  %v630 = vpack.c.b16 %v599, %v598
  %v631 = vpack.c.b16 %v601, %v600
  %v632 = vpack.c.b16 %v603, %v602
  %v633 = vpack.c.b16 %v605, %v604
  %v634 = vpack.c.b16 %v607, %v606
  %v635 = vpack.c.b16 %v609, %v608
  %v636 = vpack.c.b16 %v611, %v610
  %v637 = vpack.c.b16 %v613, %v612
  %662 = vmatprep.subr.bf16.mxu0 0
  %663 = vmatpush1.bf16.msra.mxu0 %v614
  %664 = vmatprep.subr.bf16.mxu0 0
  %665 = vmatpush1.bf16.msra.mxu0 %v615
  %666 = vmatprep.subr.bf16.mxu0 0
  %667 = vmatpush1.bf16.msra.mxu0 %v616
  %668 = vmatprep.subr.bf16.mxu0 0
  %669 = vmatpush1.bf16.msra.mxu0 %v617
  %670 = vmatprep.subr.bf16.mxu0 0
  %671 = vmatpush1.bf16.msra.mxu0 %v618
  %672 = vmatprep.subr.bf16.mxu0 0
  %673 = vmatpush1.bf16.msra.mxu0 %v619
  %674 = vmatprep.subr.bf16.mxu0 0
  %675 = vmatpush1.bf16.msra.mxu0 %v620
  %676 = vmatprep.subr.bf16.mxu0 0
  %677 = vmatpush1.bf16.msra.mxu0 %v621
  %678 = vmatprep.subr.bf16.mxu0 0
  %679 = vmatpush1.bf16.msra.mxu0 %v622
  %680 = vmatprep.subr.bf16.mxu0 0
  %681 = vmatpush1.bf16.msra.mxu0 %v623
  %682 = vmatprep.subr.bf16.mxu0 0
  %683 = vmatpush1.bf16.msra.mxu0 %v624
  %684 = vmatprep.subr.bf16.mxu0 0
  %685 = vmatpush1.bf16.msra.mxu0 %v625
  %686 = vmatprep.subr.bf16.mxu0 0
  %687 = vmatpush1.bf16.msra.mxu0 %v626
  %688 = vmatprep.subr.bf16.mxu0 0
  %689 = vmatpush1.bf16.msra.mxu0 %v627
  %690 = vmatprep.subr.bf16.mxu0 0
  %691 = vmatpush1.bf16.msra.mxu0 %v628
  %692 = vmatprep.subr.bf16.mxu0 0
  %693 = vmatpush1.bf16.msra.mxu0 %v629
  %694 = vmatprep.mubr.bf16.mxu0 %v461
  %695 = vmatmul.mubr.bf16.gmra.mrb[0].mxu0 %v460
  %v696 = vpop.f32.mrb[0].mxu0
  %v697 = vadd.f32 %v516, %v696
  %v698 = vpop.f32.mrb[0].mxu0
  %v699 = vpop.f32.mrb[0].mxu0
  %v700 = vpop.f32.mrb[0].mxu0
  %701 = vdwg.mxu0
  %702 = vmatprep.subr.bf16.mxu0 0
  %703 = vmatpush1.bf16.msra.mxu0 %v630
  %704 = vmatprep.subr.bf16.mxu0 0
  %705 = vmatpush1.bf16.msra.mxu0 %v631
  %706 = vmatprep.subr.bf16.mxu0 0
  %707 = vmatpush1.bf16.msra.mxu0 %v632
  %708 = vmatprep.subr.bf16.mxu0 0
  %709 = vmatpush1.bf16.msra.mxu0 %v633
  %710 = vmatprep.subr.bf16.mxu0 0
  %711 = vmatpush1.bf16.msra.mxu0 %v634
  %712 = vmatprep.subr.bf16.mxu0 0
  %713 = vmatpush1.bf16.msra.mxu0 %v635
  %714 = vmatprep.subr.bf16.mxu0 0
  %715 = vmatpush1.bf16.msra.mxu0 %v636
  %716 = vmatprep.subr.bf16.mxu0 0
  %717 = vmatpush1.bf16.msra.mxu0 %v637
  %718 = vmatprep.subr.bf16.mxu0 0
  %719 = vmatpush1.bf16.msra.mxu0 0
  %720 = vmatprep.subr.bf16.mxu0 0
  %721 = vmatpush1.bf16.msra.mxu0 0
  %722 = vmatprep.subr.bf16.mxu0 0
  %723 = vmatpush1.bf16.msra.mxu0 0
  %724 = vmatprep.subr.bf16.mxu0 0
  %725 = vmatpush1.bf16.msra.mxu0 0
  %726 = vmatprep.subr.bf16.mxu0 0
  %727 = vmatpush1.bf16.msra.mxu0 0
  %728 = vmatprep.subr.bf16.mxu0 0
  %729 = vmatpush1.bf16.msra.mxu0 0
  %730 = vmatprep.subr.bf16.mxu0 0
  %731 = vmatpush1.bf16.msra.mxu0 0
  %732 = vmatprep.subr.bf16.mxu0 0
  %733 = vmatpush1.bf16.msra.mxu0 0
  %734 = vmatprep.mubr.bf16.mxu0 0
  %735 = vmatmul.mubr.bf16.gmra.mrb[0].mxu0 %v462
  %v736 = vpop.f32.mrb[0].mxu0
  %v737 = vadd.f32 %v697, %v736
  %v738 = vpop.f32.mrb[0].mxu0
  %v739 = vpop.f32.mrb[0].mxu0
  %v740 = vpop.f32.mrb[0].mxu0
  %741 = vdwg.mxu0
  %v742 = vadd.f32 %v737, %v445
  %v743 = vmax.f32 %v742, 0.0
  %744 = vst [vmem:[#allocation3 + $0x1] sm:$0xff] %v743
  %v745 = vld [vmem:[#allocation3] sm:$0xff]
  %746 = vst [vmem:[#allocation2] sm:$0xff] %v745
  %v747 = vld [vmem:[#allocation3 + $0x1] sm:$0xff]
  %748 = vst [vmem:[#allocation2 + $0x8] sm:$0xff] %v747
  %v749 = vld [vmem:[#allocation3 + $0x2] sm:$0xff]
  %750 = vst [vmem:[#allocation2 + $0x10] sm:$0xff] %v749
  %v751 = vld [vmem:[#allocation2] sm:$0xff]
  %v752 = vld [vmem:[#allocation2 + $0x8] sm:$0xff]
  %v753 = vld [vmem:[#allocation2 + $0x10] sm:$0xff]
  %v754 = vpack.c.bf16 %v751, %v751
  %v755 = vpack.c.bf16 %v752, %v752
  %v756 = vpack.c.bf16 %v753, %v753
  %v757 = vld [vmem:[%s7] sm:$0xf]
  %v758 = vld [vmem:[%s7 + $0x4] sm:$0xf]
  %v759 = vld [vmem:[%s7 + $0x8] sm:$0xf]
  %v760 = vld [vmem:[%s7 + $0xc] sm:$0xf]
  %v761 = vld [vmem:[%s7 + $0x10] sm:$0xf]
  %v762 = vld [vmem:[%s7 + $0x14] sm:$0xf]
  %v763 = vld [vmem:[%s7 + $0x18] sm:$0xf]
  %v764 = vld [vmem:[%s7 + $0x1c] sm:$0xf]
  %v765 = vld [vmem:[%s7 + $0x20] sm:$0xf]
  %v766 = vld [vmem:[%s7 + $0x24] sm:$0xf]
  %v767 = vld [vmem:[%s7 + $0x28] sm:$0xf]
  %v768 = vld [vmem:[%s7 + $0x2c] sm:$0xf]
  %v769 = vld [vmem:[%s7 + $0x30] sm:$0xf]
  %v770 = vld [vmem:[%s7 + $0x34] sm:$0xf]
  %v771 = vld [vmem:[%s7 + $0x38] sm:$0xf]
  %v772 = vld [vmem:[%s7 + $0x3c] sm:$0xf]
  %v773 = vld [vmem:[%s7 + $0x40] sm:$0xf]
  %v774 = vld [vmem:[%s7 + $0x44] sm:$0xf]
  %v775 = vld [vmem:[%s7 + $0x48] sm:$0xf]
  %v776 = vld [vmem:[%s7 + $0x4c] sm:$0xf]
  %v777 = vld [vmem:[%s7 + $0x50] sm:$0xf]
  %v778 = vld [vmem:[%s7 + $0x54] sm:$0xf]
  %v779 = vld [vmem:[%s7 + $0x58] sm:$0xf]
  %v780 = vld [vmem:[%s7 + $0x5c] sm:$0xf]
  %v781 = vld [vmem:[%s7 + $0x60] sm:$0xf]
  %v782 = vld [vmem:[%s7 + $0x64] sm:$0xf]
  %v783 = vld [vmem:[%s7 + $0x68] sm:$0xf]
  %v784 = vld [vmem:[%s7 + $0x6c] sm:$0xf]
  %v785 = vld [vmem:[%s7 + $0x70] sm:$0xf]
  %v786 = vld [vmem:[%s7 + $0x74] sm:$0xf]
  %v787 = vld [vmem:[%s7 + $0x78] sm:$0xf]
  %v788 = vld [vmem:[%s7 + $0x7c] sm:$0xf]
  %v789 = vld [vmem:[%s7 + $0x80] sm:$0xf]
  %v790 = vld [vmem:[%s7 + $0x84] sm:$0xf]
  %v791 = vld [vmem:[%s7 + $0x88] sm:$0xf]
  %v792 = vld [vmem:[%s7 + $0x8c] sm:$0xf]
  %v793 = vld [vmem:[%s7 + $0x90] sm:$0xf]
  %v794 = vld [vmem:[%s7 + $0x94] sm:$0xf]
  %v795 = vld [vmem:[%s7 + $0x98] sm:$0xf]
  %v796 = vld [vmem:[%s7 + $0x9c] sm:$0xf]
  %v797 = vld [vmem:[%s7 + $0xa0] sm:$0xf]
  %v798 = vld [vmem:[%s7 + $0xa4] sm:$0xf]
  %v799 = vld [vmem:[%s7 + $0xa8] sm:$0xf]
  %v800 = vld [vmem:[%s7 + $0xac] sm:$0xf]
  %v801 = vld [vmem:[%s7 + $0xb0] sm:$0xf]
  %v802 = vld [vmem:[%s7 + $0xb4] sm:$0xf]
  %v803 = vld [vmem:[%s7 + $0xb8] sm:$0xf]
  %v804 = vld [vmem:[%s7 + $0xbc] sm:$0xf]
  %v805 = vld [vmem:[%s8] sm:$0x1]
  %v807 = vlaneseq
  %v808 = vshrl.u32 %v807, 7
  %v809 = vsub.s32 0, %v808
  %v810 = vrot.slane %v805, %v809
  %v860 = vunpack.c.l.b16 %v757
  %v861 = vunpack.c.l.b16 %v758
  %v862 = vunpack.c.l.b16 %v759
  %v863 = vunpack.c.l.b16 %v760
  %v864 = vunpack.c.l.b16 %v761
  %v865 = vunpack.c.l.b16 %v762
  %v866 = vunpack.c.l.b16 %v763
  %v867 = vunpack.c.l.b16 %v764
  %v868 = vunpack.c.l.b16 %v765
  %v869 = vunpack.c.l.b16 %v766
  %v870 = vunpack.c.l.b16 %v767
  %v871 = vunpack.c.l.b16 %v768
  %v872 = vunpack.c.l.b16 %v769
  %v873 = vunpack.c.l.b16 %v770
  %v874 = vunpack.c.l.b16 %v771
  %v875 = vunpack.c.l.b16 %v772
  %v876 = vunpack.c.l.b16 %v773
  %v877 = vunpack.c.l.b16 %v774
  %v878 = vunpack.c.l.b16 %v775
  %v879 = vunpack.c.l.b16 %v776
  %v880 = vunpack.c.l.b16 %v777
  %v881 = vunpack.c.l.b16 %v778
  %v882 = vunpack.c.l.b16 %v779
  %v883 = vunpack.c.l.b16 %v780
  %v884 = vunpack.c.l.b16 %v781
  %v885 = vunpack.c.l.b16 %v782
  %v886 = vunpack.c.l.b16 %v783
  %v887 = vunpack.c.l.b16 %v784
  %v888 = vunpack.c.l.b16 %v785
  %v889 = vunpack.c.l.b16 %v786
  %v890 = vunpack.c.l.b16 %v787
  %v891 = vunpack.c.l.b16 %v788
  %v892 = vunpack.c.l.b16 %v789
  %v893 = vunpack.c.l.b16 %v790
  %v894 = vunpack.c.l.b16 %v791
  %v895 = vunpack.c.l.b16 %v792
  %v896 = vunpack.c.l.b16 %v793
  %v897 = vunpack.c.l.b16 %v794
  %v898 = vunpack.c.l.b16 %v795
  %v899 = vunpack.c.l.b16 %v796
  %v900 = vunpack.c.l.b16 %v797
  %v901 = vunpack.c.l.b16 %v798
  %v902 = vunpack.c.l.b16 %v799
  %v903 = vunpack.c.l.b16 %v800
  %v904 = vunpack.c.l.b16 %v801
  %v905 = vunpack.c.l.b16 %v802
  %v906 = vunpack.c.l.b16 %v803
  %v907 = vunpack.c.l.b16 %v804
  %v908 = vpack.c.b16 %v861, %v860
  %v909 = vpack.c.b16 %v863, %v862
  %v910 = vpack.c.b16 %v865, %v864
  %v911 = vpack.c.b16 %v867, %v866
  %v912 = vpack.c.b16 %v869, %v868
  %v913 = vpack.c.b16 %v871, %v870
  %v914 = vpack.c.b16 %v873, %v872
  %v915 = vpack.c.b16 %v875, %v874
  %v916 = vpack.c.b16 %v877, %v876
  %v917 = vpack.c.b16 %v879, %v878
  %v918 = vpack.c.b16 %v881, %v880
  %v919 = vpack.c.b16 %v883, %v882
  %v920 = vpack.c.b16 %v885, %v884
  %v921 = vpack.c.b16 %v887, %v886
  %v922 = vpack.c.b16 %v889, %v888
  %v923 = vpack.c.b16 %v891, %v890
  %v924 = vpack.c.b16 %v893, %v892
  %v925 = vpack.c.b16 %v895, %v894
  %v926 = vpack.c.b16 %v897, %v896
  %v927 = vpack.c.b16 %v899, %v898
  %v928 = vpack.c.b16 %v901, %v900
  %v929 = vpack.c.b16 %v903, %v902
  %v930 = vpack.c.b16 %v905, %v904
  %v931 = vpack.c.b16 %v907, %v906
  %956 = vmatprep.subr.bf16.mxu0 0
  %957 = vmatpush1.bf16.msra.mxu0 %v908
  %958 = vmatprep.subr.bf16.mxu0 0
  %959 = vmatpush1.bf16.msra.mxu0 %v909
  %960 = vmatprep.subr.bf16.mxu0 0
  %961 = vmatpush1.bf16.msra.mxu0 %v910
  %962 = vmatprep.subr.bf16.mxu0 0
  %963 = vmatpush1.bf16.msra.mxu0 %v911
  %964 = vmatprep.subr.bf16.mxu0 0
  %965 = vmatpush1.bf16.msra.mxu0 %v912
  %966 = vmatprep.subr.bf16.mxu0 0
  %967 = vmatpush1.bf16.msra.mxu0 %v913
  %968 = vmatprep.subr.bf16.mxu0 0
  %969 = vmatpush1.bf16.msra.mxu0 %v914
  %970 = vmatprep.subr.bf16.mxu0 0
  %971 = vmatpush1.bf16.msra.mxu0 %v915
  %972 = vmatprep.subr.bf16.mxu0 0
  %973 = vmatpush1.bf16.msra.mxu0 %v916
  %974 = vmatprep.subr.bf16.mxu0 0
  %975 = vmatpush1.bf16.msra.mxu0 %v917
  %976 = vmatprep.subr.bf16.mxu0 0
  %977 = vmatpush1.bf16.msra.mxu0 %v918
  %978 = vmatprep.subr.bf16.mxu0 0
  %979 = vmatpush1.bf16.msra.mxu0 %v919
  %980 = vmatprep.subr.bf16.mxu0 0
  %981 = vmatpush1.bf16.msra.mxu0 %v920
  %982 = vmatprep.subr.bf16.mxu0 0
  %983 = vmatpush1.bf16.msra.mxu0 %v921
  %984 = vmatprep.subr.bf16.mxu0 0
  %985 = vmatpush1.bf16.msra.mxu0 %v922
  %986 = vmatprep.subr.bf16.mxu0 0
  %987 = vmatpush1.bf16.msra.mxu0 %v923
  %988 = vmatprep.mubr.bf16.mxu0 %v755
  %989 = vmatmul.mubr.bf16.gmra.mrb[0].mxu0 %v754
  %v990 = vpop.f32.mrb[0].mxu0
  %v991 = vadd.f32 %v810, %v990
  %v992 = vpop.f32.mrb[0].mxu0
  %v993 = vpop.f32.mrb[0].mxu0
  %v994 = vpop.f32.mrb[0].mxu0
  %995 = vdwg.mxu0
  %996 = vmatprep.subr.bf16.mxu0 0
  %997 = vmatpush1.bf16.msra.mxu0 %v924
  %998 = vmatprep.subr.bf16.mxu0 0
  %999 = vmatpush1.bf16.msra.mxu0 %v925
  %1000 = vmatprep.subr.bf16.mxu0 0
  %1001 = vmatpush1.bf16.msra.mxu0 %v926
  %1002 = vmatprep.subr.bf16.mxu0 0
  %1003 = vmatpush1.bf16.msra.mxu0 %v927
  %1004 = vmatprep.subr.bf16.mxu0 0
  %1005 = vmatpush1.bf16.msra.mxu0 %v928
  %1006 = vmatprep.subr.bf16.mxu0 0
  %1007 = vmatpush1.bf16.msra.mxu0 %v929
  %1008 = vmatprep.subr.bf16.mxu0 0
  %1009 = vmatpush1.bf16.msra.mxu0 %v930
  %1010 = vmatprep.subr.bf16.mxu0 0
  %1011 = vmatpush1.bf16.msra.mxu0 %v931
  %1012 = vmatprep.subr.bf16.mxu0 0
  %1013 = vmatpush1.bf16.msra.mxu0 0
  %1014 = vmatprep.subr.bf16.mxu0 0
  %1015 = vmatpush1.bf16.msra.mxu0 0
  %1016 = vmatprep.subr.bf16.mxu0 0
  %1017 = vmatpush1.bf16.msra.mxu0 0
  %1018 = vmatprep.subr.bf16.mxu0 0
  %1019 = vmatpush1.bf16.msra.mxu0 0
  %1020 = vmatprep.subr.bf16.mxu0 0
  %1021 = vmatpush1.bf16.msra.mxu0 0
  %1022 = vmatprep.subr.bf16.mxu0 0
  %1023 = vmatpush1.bf16.msra.mxu0 0
  %1024 = vmatprep.subr.bf16.mxu0 0
  %1025 = vmatpush1.bf16.msra.mxu0 0
  %1026 = vmatprep.subr.bf16.mxu0 0
  %1027 = vmatpush1.bf16.msra.mxu0 0
  %1028 = vmatprep.mubr.bf16.mxu0 0
  %1029 = vmatmul.mubr.bf16.gmra.mrb[0].mxu0 %v756
  %v1030 = vpop.f32.mrb[0].mxu0
  %v1031 = vadd.f32 %v991, %v1030
  %v1032 = vpop.f32.mrb[0].mxu0
  %v1033 = vpop.f32.mrb[0].mxu0
  %v1034 = vpop.f32.mrb[0].mxu0
  %1035 = vdwg.mxu0
  %v1036 = vmax.f32 %v1031, 0.0
  %1037 = vst [vmem:[#allocation3 + $0x1] sm:$0xff] %v1036
  %v1038 = vld [vmem:[#allocation3] sm:$0xff]
  %1039 = vst [vmem:[#allocation2] sm:$0xff] %v1038
  %v1040 = vld [vmem:[#allocation3 + $0x1] sm:$0xff]
  %1041 = vst [vmem:[#allocation2 + $0x8] sm:$0xff] %v1040
  %v1042 = vld [vmem:[#allocation3 + $0x2] sm:$0xff]
  %1043 = vst [vmem:[#allocation2 + $0x10] sm:$0xff] %v1042
  %v1044 = vld [vmem:[#allocation2] sm:$0xff]
  %v1045 = vld [vmem:[#allocation2 + $0x8] sm:$0xff]
  %v1046 = vld [vmem:[#allocation2 + $0x10] sm:$0xff]
  %v1047 = vpack.c.bf16 %v1044, %v1044
  %v1048 = vpack.c.bf16 %v1045, %v1045
  %v1049 = vpack.c.bf16 %v1046, %v1046
  %v1050 = vld [vmem:[%s9] sm:$0xf]
  %v1051 = vld [vmem:[%s9 + $0x4] sm:$0xf]
  %v1052 = vld [vmem:[%s9 + $0x8] sm:$0xf]
  %v1053 = vld [vmem:[%s9 + $0xc] sm:$0xf]
  %v1054 = vld [vmem:[%s9 + $0x10] sm:$0xf]
  %v1055 = vld [vmem:[%s9 + $0x14] sm:$0xf]
  %v1056 = vld [vmem:[%s9 + $0x18] sm:$0xf]
  %v1057 = vld [vmem:[%s9 + $0x1c] sm:$0xf]
  %v1058 = vld [vmem:[%s9 + $0x20] sm:$0xf]
  %v1059 = vld [vmem:[%s9 + $0x24] sm:$0xf]
  %v1060 = vld [vmem:[%s9 + $0x28] sm:$0xf]
  %v1061 = vld [vmem:[%s9 + $0x2c] sm:$0xf]
  %v1062 = vld [vmem:[%s9 + $0x30] sm:$0xf]
  %v1063 = vld [vmem:[%s9 + $0x34] sm:$0xf]
  %v1064 = vld [vmem:[%s9 + $0x38] sm:$0xf]
  %v1065 = vld [vmem:[%s9 + $0x3c] sm:$0xf]
  %v1066 = vld [vmem:[%s9 + $0x40] sm:$0xf]
  %v1067 = vld [vmem:[%s9 + $0x44] sm:$0xf]
  %v1068 = vld [vmem:[%s9 + $0x48] sm:$0xf]
  %v1069 = vld [vmem:[%s9 + $0x4c] sm:$0xf]
  %v1070 = vld [vmem:[%s9 + $0x50] sm:$0xf]
  %v1071 = vld [vmem:[%s9 + $0x54] sm:$0xf]
  %v1072 = vld [vmem:[%s9 + $0x58] sm:$0xf]
  %v1073 = vld [vmem:[%s9 + $0x5c] sm:$0xf]
  %v1074 = vld [vmem:[%s9 + $0x60] sm:$0xf]
  %v1075 = vld [vmem:[%s9 + $0x64] sm:$0xf]
  %v1076 = vld [vmem:[%s9 + $0x68] sm:$0xf]
  %v1077 = vld [vmem:[%s9 + $0x6c] sm:$0xf]
  %v1078 = vld [vmem:[%s9 + $0x70] sm:$0xf]
  %v1079 = vld [vmem:[%s9 + $0x74] sm:$0xf]
  %v1080 = vld [vmem:[%s9 + $0x78] sm:$0xf]
  %v1081 = vld [vmem:[%s9 + $0x7c] sm:$0xf]
  %v1082 = vld [vmem:[%s9 + $0x80] sm:$0xf]
  %v1083 = vld [vmem:[%s9 + $0x84] sm:$0xf]
  %v1084 = vld [vmem:[%s9 + $0x88] sm:$0xf]
  %v1085 = vld [vmem:[%s9 + $0x8c] sm:$0xf]
  %v1086 = vld [vmem:[%s9 + $0x90] sm:$0xf]
  %v1087 = vld [vmem:[%s9 + $0x94] sm:$0xf]
  %v1088 = vld [vmem:[%s9 + $0x98] sm:$0xf]
  %v1089 = vld [vmem:[%s9 + $0x9c] sm:$0xf]
  %v1090 = vld [vmem:[%s9 + $0xa0] sm:$0xf]
  %v1091 = vld [vmem:[%s9 + $0xa4] sm:$0xf]
  %v1092 = vld [vmem:[%s9 + $0xa8] sm:$0xf]
  %v1093 = vld [vmem:[%s9 + $0xac] sm:$0xf]
  %v1094 = vld [vmem:[%s9 + $0xb0] sm:$0xf]
  %v1095 = vld [vmem:[%s9 + $0xb4] sm:$0xf]
  %v1096 = vld [vmem:[%s9 + $0xb8] sm:$0xf]
  %v1097 = vld [vmem:[%s9 + $0xbc] sm:$0xf]
  %v1098 = vld [vmem:[%s10] sm:$0x1]
  %v1100 = vlaneseq
  %v1101 = vshrl.u32 %v1100, 7
  %v1102 = vsub.s32 0, %v1101
  %v1103 = vrot.slane %v1098, %v1102
  %v1153 = vunpack.c.l.b16 %v1050
  %v1154 = vunpack.c.l.b16 %v1051
  %v1155 = vunpack.c.l.b16 %v1052
  %v1156 = vunpack.c.l.b16 %v1053
  %v1157 = vunpack.c.l.b16 %v1054
  %v1158 = vunpack.c.l.b16 %v1055
  %v1159 = vunpack.c.l.b16 %v1056
  %v1160 = vunpack.c.l.b16 %v1057
  %v1161 = vunpack.c.l.b16 %v1058
  %v1162 = vunpack.c.l.b16 %v1059
  %v1163 = vunpack.c.l.b16 %v1060
  %v1164 = vunpack.c.l.b16 %v1061
  %v1165 = vunpack.c.l.b16 %v1062
  %v1166 = vunpack.c.l.b16 %v1063
  %v1167 = vunpack.c.l.b16 %v1064
  %v1168 = vunpack.c.l.b16 %v1065
  %v1169 = vunpack.c.l.b16 %v1066
  %v1170 = vunpack.c.l.b16 %v1067
  %v1171 = vunpack.c.l.b16 %v1068
  %v1172 = vunpack.c.l.b16 %v1069
  %v1173 = vunpack.c.l.b16 %v1070
  %v1174 = vunpack.c.l.b16 %v1071
  %v1175 = vunpack.c.l.b16 %v1072
  %v1176 = vunpack.c.l.b16 %v1073
  %v1177 = vunpack.c.l.b16 %v1074
  %v1178 = vunpack.c.l.b16 %v1075
  %v1179 = vunpack.c.l.b16 %v1076
  %v1180 = vunpack.c.l.b16 %v1077
  %v1181 = vunpack.c.l.b16 %v1078
  %v1182 = vunpack.c.l.b16 %v1079
  %v1183 = vunpack.c.l.b16 %v1080
  %v1184 = vunpack.c.l.b16 %v1081
  %v1185 = vunpack.c.l.b16 %v1082
  %v1186 = vunpack.c.l.b16 %v1083
  %v1187 = vunpack.c.l.b16 %v1084
  %v1188 = vunpack.c.l.b16 %v1085
  %v1189 = vunpack.c.l.b16 %v1086
  %v1190 = vunpack.c.l.b16 %v1087
  %v1191 = vunpack.c.l.b16 %v1088
  %v1192 = vunpack.c.l.b16 %v1089
  %v1193 = vunpack.c.l.b16 %v1090
  %v1194 = vunpack.c.l.b16 %v1091
  %v1195 = vunpack.c.l.b16 %v1092
  %v1196 = vunpack.c.l.b16 %v1093
  %v1197 = vunpack.c.l.b16 %v1094
  %v1198 = vunpack.c.l.b16 %v1095
  %v1199 = vunpack.c.l.b16 %v1096
  %v1200 = vunpack.c.l.b16 %v1097
  %v1201 = vpack.c.b16 %v1154, %v1153
  %v1202 = vpack.c.b16 %v1156, %v1155
  %v1203 = vpack.c.b16 %v1158, %v1157
  %v1204 = vpack.c.b16 %v1160, %v1159
  %v1205 = vpack.c.b16 %v1162, %v1161
  %v1206 = vpack.c.b16 %v1164, %v1163
  %v1207 = vpack.c.b16 %v1166, %v1165
  %v1208 = vpack.c.b16 %v1168, %v1167
  %v1209 = vpack.c.b16 %v1170, %v1169
  %v1210 = vpack.c.b16 %v1172, %v1171
  %v1211 = vpack.c.b16 %v1174, %v1173
  %v1212 = vpack.c.b16 %v1176, %v1175
  %v1213 = vpack.c.b16 %v1178, %v1177
  %v1214 = vpack.c.b16 %v1180, %v1179
  %v1215 = vpack.c.b16 %v1182, %v1181
  %v1216 = vpack.c.b16 %v1184, %v1183
  %v1217 = vpack.c.b16 %v1186, %v1185
  %v1218 = vpack.c.b16 %v1188, %v1187
  %v1219 = vpack.c.b16 %v1190, %v1189
  %v1220 = vpack.c.b16 %v1192, %v1191
  %v1221 = vpack.c.b16 %v1194, %v1193
  %v1222 = vpack.c.b16 %v1196, %v1195
  %v1223 = vpack.c.b16 %v1198, %v1197
  %v1224 = vpack.c.b16 %v1200, %v1199
  %1249 = vmatprep.subr.bf16.mxu0 0
  %1250 = vmatpush1.bf16.msra.mxu0 %v1201
  %1251 = vmatprep.subr.bf16.mxu0 0
  %1252 = vmatpush1.bf16.msra.mxu0 %v1202
  %1253 = vmatprep.subr.bf16.mxu0 0
  %1254 = vmatpush1.bf16.msra.mxu0 %v1203
  %1255 = vmatprep.subr.bf16.mxu0 0
  %1256 = vmatpush1.bf16.msra.mxu0 %v1204
  %1257 = vmatprep.subr.bf16.mxu0 0
  %1258 = vmatpush1.bf16.msra.mxu0 %v1205
  %1259 = vmatprep.subr.bf16.mxu0 0
  %1260 = vmatpush1.bf16.msra.mxu0 %v1206
  %1261 = vmatprep.subr.bf16.mxu0 0
  %1262 = vmatpush1.bf16.msra.mxu0 %v1207
  %1263 = vmatprep.subr.bf16.mxu0 0
  %1264 = vmatpush1.bf16.msra.mxu0 %v1208
  %1265 = vmatprep.subr.bf16.mxu0 0
  %1266 = vmatpush1.bf16.msra.mxu0 %v1209
  %1267 = vmatprep.subr.bf16.mxu0 0
  %1268 = vmatpush1.bf16.msra.mxu0 %v1210
  %1269 = vmatprep.subr.bf16.mxu0 0
  %1270 = vmatpush1.bf16.msra.mxu0 %v1211
  %1271 = vmatprep.subr.bf16.mxu0 0
  %1272 = vmatpush1.bf16.msra.mxu0 %v1212
  %1273 = vmatprep.subr.bf16.mxu0 0
  %1274 = vmatpush1.bf16.msra.mxu0 %v1213
  %1275 = vmatprep.subr.bf16.mxu0 0
  %1276 = vmatpush1.bf16.msra.mxu0 %v1214
  %1277 = vmatprep.subr.bf16.mxu0 0
  %1278 = vmatpush1.bf16.msra.mxu0 %v1215
  %1279 = vmatprep.subr.bf16.mxu0 0
  %1280 = vmatpush1.bf16.msra.mxu0 %v1216
  %1281 = vmatprep.mubr.bf16.mxu0 %v1048
  %1282 = vmatmul.mubr.bf16.gmra.mrb[0].mxu0 %v1047
  %v1283 = vpop.f32.mrb[0].mxu0
  %v1284 = vadd.f32 %v1103, %v1283
  %v1285 = vpop.f32.mrb[0].mxu0
  %v1286 = vpop.f32.mrb[0].mxu0
  %v1287 = vpop.f32.mrb[0].mxu0
  %1288 = vdwg.mxu0
  %1289 = vmatprep.subr.bf16.mxu0 0
  %1290 = vmatpush1.bf16.msra.mxu0 %v1217
  %1291 = vmatprep.subr.bf16.mxu0 0
  %1292 = vmatpush1.bf16.msra.mxu0 %v1218
  %1293 = vmatprep.subr.bf16.mxu0 0
  %1294 = vmatpush1.bf16.msra.mxu0 %v1219
  %1295 = vmatprep.subr.bf16.mxu0 0
  %1296 = vmatpush1.bf16.msra.mxu0 %v1220
  %1297 = vmatprep.subr.bf16.mxu0 0
  %1298 = vmatpush1.bf16.msra.mxu0 %v1221
  %1299 = vmatprep.subr.bf16.mxu0 0
  %1300 = vmatpush1.bf16.msra.mxu0 %v1222
  %1301 = vmatprep.subr.bf16.mxu0 0
  %1302 = vmatpush1.bf16.msra.mxu0 %v1223
  %1303 = vmatprep.subr.bf16.mxu0 0
  %1304 = vmatpush1.bf16.msra.mxu0 %v1224
  %1305 = vmatprep.subr.bf16.mxu0 0
  %1306 = vmatpush1.bf16.msra.mxu0 0
  %1307 = vmatprep.subr.bf16.mxu0 0
  %1308 = vmatpush1.bf16.msra.mxu0 0
  %1309 = vmatprep.subr.bf16.mxu0 0
  %1310 = vmatpush1.bf16.msra.mxu0 0
  %1311 = vmatprep.subr.bf16.mxu0 0
  %1312 = vmatpush1.bf16.msra.mxu0 0
  %1313 = vmatprep.subr.bf16.mxu0 0
  %1314 = vmatpush1.bf16.msra.mxu0 0
  %1315 = vmatprep.subr.bf16.mxu0 0
  %1316 = vmatpush1.bf16.msra.mxu0 0
  %1317 = vmatprep.subr.bf16.mxu0 0
  %1318 = vmatpush1.bf16.msra.mxu0 0
  %1319 = vmatprep.subr.bf16.mxu0 0
  %1320 = vmatpush1.bf16.msra.mxu0 0
  %1321 = vmatprep.mubr.bf16.mxu0 0
  %1322 = vmatmul.mubr.bf16.gmra.mrb[0].mxu0 %v1049
  %v1323 = vpop.f32.mrb[0].mxu0
  %v1324 = vadd.f32 %v1284, %v1323
  %v1325 = vpop.f32.mrb[0].mxu0
  %v1326 = vpop.f32.mrb[0].mxu0
  %v1327 = vpop.f32.mrb[0].mxu0
  %1328 = vdwg.mxu0
  %v1329 = vadd.f32 %v1324, %v743
  %v1330 = vmax.f32 %v1329, 0.0
  %1331 = vst [vmem:[%s11] sm:$0xff] %v1330
  // Predicated region
  $region46: #{_lambda_.1} parent=0 // pred_check
    _
  $region47: #{_lambda_.1} parent=0 // pred_check_branch
    %1333 = sbr.rel (0) target = $region49
  $region48: #{_lambda_.1} parent=0 // pred_region
    _
  $region49: #{_lambda_.1} parent=0 // pred_fallthru
    _
  // Predicated region
  $region50: #{_lambda_.1} parent=0 // pred_check
    _
  $region51: #{_lambda_.1} parent=0 // pred_check_branch
    %1335 = sbr.rel (0) target = $region53
  $region52: #{_lambda_.1} parent=0 // pred_region
    _
  $region53: #{_lambda_.1} parent=0 // pred_fallthru
    _

</llo_original>
